<compile_context>
chip_gen: v7x
topology: tpu7x:2x2x1
jax: 0.10.0
libtpu: 0.0.40
codegen_flags: <defaults>
</compile_context>

<pallas_src>
import functools

import jax
import jax.numpy as jnp
from jax import lax
from jax.experimental import pallas as pl
from jax.experimental.pallas import tpu as pltpu


_VMEM_LIMIT = 32 * 1024 * 1024   # explicit: v5e default scoped limit is only 16 MiB
_NEG_LARGE = -1e30               # finite "-inf" so online-softmax algebra stays NaN-free


# --------------------------------------------------------------------------
# helpers
# --------------------------------------------------------------------------

def _pick_tile(dim, pref, align):
    """Largest divisor of `dim` <= pref that is a multiple of `align`
    (fallback: multiple of 8, then the full dim — always a legal block)."""
    if dim <= pref:
        return dim
    for a in (align, 8):
        start = pref - (pref % a)
        for t in range(start, a - 1, -a):
            if dim % t == 0:
                return t
    return dim


def _erf(x):
    # Abramowitz & Stegun 7.1.26 (max abs err ~1.5e-7) — exp-only, lowers on EUP.
    a1, a2, a3, a4, a5 = 0.254829592, -0.284496736, 1.421413741, -1.453152027, 1.061405429
    p = 0.3275911
    s = jnp.where(x >= 0, 1.0, -1.0)
    z = jnp.abs(x)
    t = 1.0 / (1.0 + p * z)
    poly = ((((a5 * t + a4) * t + a3) * t + a2) * t + a1) * t
    return s * (1.0 - poly * jnp.exp(-z * z))


def _gelu_exact(x):
    return 0.5 * x * (1.0 + _erf(x * (2.0 ** -0.5)))


# --------------------------------------------------------------------------
# Standalone LayerNorm kernel (stats computed once per row)
# --------------------------------------------------------------------------

def _ln_kernel(x_ref, g_ref, b_ref, o_ref):
    x = x_ref[...].astype(jnp.float32)
    mean = jnp.mean(x, axis=-1, keepdims=True)
    c = x - mean
    var = jnp.mean(c * c, axis=-1, keepdims=True)
    y = c * lax.rsqrt(var + 1e-5)            # PyTorch LayerNorm default eps
    y = y * g_ref[...] + b_ref[...]
    o_ref[...] = y.astype(o_ref.dtype)       # LayerNorm(...).type(x.dtype)


def layer_norm(x, gamma, beta):
    """x: (M, D) -> (M, D), same dtype as x."""
    M, D = x.shape
    tm = _pick_tile(M, 1024, 16)
    return pl.pallas_call(
        _ln_kernel,
        out_shape=jax.ShapeDtypeStruct((M, D), x.dtype),
        grid=(M // tm,),
        in_specs=[pl.BlockSpec((tm, D), lambda i: (i, 0)),
                  pl.BlockSpec((1, D), lambda i: (0, 0)),
                  pl.BlockSpec((1, D), lambda i: (0, 0))],
        out_specs=pl.BlockSpec((tm, D), lambda i: (i, 0)),
        compiler_params=pltpu.CompilerParams(
            dimension_semantics=("parallel",),
            vmem_limit_bytes=_VMEM_LIMIT),
    )(x, gamma.reshape(1, D).astype(jnp.float32),
      beta.reshape(1, D).astype(jnp.float32))


# --------------------------------------------------------------------------
# Tiled linear kernel (optional fused bias + exact-GELU epilogue)
# --------------------------------------------------------------------------

def _matmul_kernel(*refs, has_bias, activation, use_acc):
    idx = 0
    x_ref = refs[idx]; idx += 1
    w_ref = refs[idx]; idx += 1
    b_ref = None
    if has_bias:
        b_ref = refs[idx]; idx += 1
    o_ref = refs[idx]; idx += 1
    acc_ref = refs[idx] if use_acc else None

    def epilogue(r):
        if has_bias:
            r = r + b_ref[...].astype(jnp.float32)
        if activation == "gelu":
            r = _gelu_exact(r)
        return r.astype(o_ref.dtype)

    if not use_acc:
        # Single K step: no accumulator scratch, write straight to o_ref.
        r = jnp.dot(x_ref[...], w_ref[...], preferred_element_type=jnp.float32)
        o_ref[...] = epilogue(r)
    else:
        k_step = pl.program_id(2)

        @pl.when(k_step == 0)
        def _():
            acc_ref[...] = jnp.zeros_like(acc_ref)

        acc_ref[...] += jnp.dot(x_ref[...], w_ref[...],
                                preferred_element_type=jnp.float32)

        @pl.when(k_step == pl.num_programs(2) - 1)
        def _():
            o_ref[...] = epilogue(acc_ref[...])


def linear(x, w, b=None, *, activation=None, out_dtype=None,
           tm_pref=512, tn_pref=512, tk_pref=512):
    """y = [gelu](x @ w (+ b)).  x: (M, K); w: (K, N); b: (1, N) or None."""
    M, K = x.shape
    Kw, N = w.shape
    assert Kw == K
    out_dtype = out_dtype or x.dtype

    # Cover the full M in one row tile when it fits -> weights streamed once.
    tm = _pick_tile(M, tm_pref, 16)
    tn = _pick_tile(N, tn_pref, 128)
    tk = _pick_tile(K, tk_pref, 128)
    n_k = K // tk
    grid = (M // tm, N // tn, n_k)

    in_specs = [pl.BlockSpec((tm, tk), lambda i, j, k: (i, k)),
                pl.BlockSpec((tk, tn), lambda i, j, k: (k, j))]
    inputs = [x, w]
    if b is not None:
        in_specs.append(pl.BlockSpec((1, tn), lambda i, j, k: (0, j)))
        inputs.append(b)

    use_acc = n_k > 1
    kernel = functools.partial(_matmul_kernel, has_bias=b is not None,
                               activation=activation, use_acc=use_acc)
    scratch = [pltpu.VMEM((tm, tn), jnp.float32)] if use_acc else []

    return pl.pallas_call(
        kernel,
        out_shape=jax.ShapeDtypeStruct((M, N), out_dtype),
        grid=grid,
        in_specs=in_specs,
        out_specs=pl.BlockSpec((tm, tn), lambda i, j, k: (i, j)),
        scratch_shapes=scratch,
        compiler_params=pltpu.CompilerParams(
            dimension_semantics=("parallel", "parallel", "arbitrary"),
            vmem_limit_bytes=_VMEM_LIMIT),
    )(*inputs)


# --------------------------------------------------------------------------
# Flash-style attention: grid = (batch*heads, kv_tiles), online softmax
# --------------------------------------------------------------------------

def _mha_kernel(q_ref, k_ref, v_ref, o_ref, m_sc, l_sc, acc_sc, *,
                sm_scale, causal, kv_len, tkv, mask_pad):
    kv_i = pl.program_id(1)

    @pl.when(kv_i == 0)
    def _():
        m_sc[...] = jnp.full_like(m_sc, _NEG_LARGE)
        l_sc[...] = jnp.zeros_like(l_sc)
        acc_sc[...] = jnp.zeros_like(acc_sc)

    q = q_ref[0]                               # (Tq, dh)
    k = k_ref[0]                               # (tkv, dh)
    v = v_ref[0]                               # (tkv, dh)
    # Scores in f32; the (dh**-0.25)^2 q/k scale is a single scalar multiply.
    s = lax.dot_general(q, k, (((1,), (1,)), ((), ())),
                        preferred_element_type=jnp.float32) * sm_scale

    tq = q.shape[0]
    if causal or mask_pad:
        col = kv_i * tkv + lax.broadcasted_iota(jnp.int32, (tq, tkv), 1)
    if causal:                                 # offset=0 / kv_cache=None mask
        row = lax.broadcasted_iota(jnp.int32, (tq, tkv), 0)
        s = jnp.where(col > row, -jnp.inf, s)
    if mask_pad:                               # zero-padded KV tail
        s = jnp.where(col >= kv_len, -jnp.inf, s)

    m_prev = m_sc[...]
    m_new = jnp.maximum(m_prev, jnp.max(s, axis=-1, keepdims=True))
    alpha = jnp.exp(m_prev - m_new)
    p = jnp.exp(s - m_new)
    l_sc[...] = alpha * l_sc[...] + jnp.sum(p, axis=-1, keepdims=True)
    acc_sc[...] = alpha * acc_sc[...] + jnp.dot(p.astype(v.dtype), v,
                                                preferred_element_type=jnp.float32)
    m_sc[...] = m_new

    @pl.when(kv_i == pl.num_programs(1) - 1)
    def _():
        o_ref[0] = (acc_sc[...] * pl.reciprocal(l_sc[...], approx=True)
                    ).astype(o_ref.dtype)


def mha(q, k, v, *, causal, kv_tile=512):
    """q: (B*H, Tq, dh); k, v: (B*H, Tk, dh) -> (B*H, Tq, dh)."""
    BH, Tq, dh = q.shape
    Tk = k.shape[1]

    if Tk <= kv_tile:
        tkv, Tk_pad, mask_pad = Tk, Tk, False
    else:
        tkv = kv_tile                                   # multiple of 8
        Tk_pad = pl.cdiv(Tk, tkv) * tkv
        mask_pad = Tk_pad != Tk
        if mask_pad:
            pad = ((0, 0), (0, Tk_pad - Tk), (0, 0))
            k = jnp.pad(k, pad)
            v = jnp.pad(v, pad)

    sm_scale = float(dh) ** (-0.5)
    kernel = functools.partial(_mha_kernel, sm_scale=sm_scale, causal=causal,
                               kv_len=Tk, tkv=tkv, mask_pad=mask_pad)
    return pl.pallas_call(
        kernel,
        out_shape=jax.ShapeDtypeStruct((BH, Tq, dh), q.dtype),
        grid=(BH, Tk_pad // tkv),
        in_specs=[pl.BlockSpec((1, Tq, dh), lambda b, j: (b, 0, 0)),
                  pl.BlockSpec((1, tkv, dh), lambda b, j: (b, j, 0)),
                  pl.BlockSpec((1, tkv, dh), lambda b, j: (b, j, 0))],
        out_specs=pl.BlockSpec((1, Tq, dh), lambda b, j: (b, 0, 0)),
        scratch_shapes=[pltpu.VMEM((Tq, 1), jnp.float32),
                        pltpu.VMEM((Tq, 1), jnp.float32),
                        pltpu.VMEM((Tq, dh), jnp.float32)],
        compiler_params=pltpu.CompilerParams(
            dimension_semantics=("parallel", "arbitrary"),
            vmem_limit_bytes=_VMEM_LIMIT),
    )(q, k, v)


# --------------------------------------------------------------------------
# Module logic (thin JAX glue around the kernels)
# --------------------------------------------------------------------------

def _split_heads(x2d, B, T, H, dh):
    # (B*T, H*dh) -> (B*H, T, dh)
    return x2d.reshape(B, T, H, dh).transpose(0, 2, 1, 3).reshape(B * H, T, dh)


def _merge_heads(x, B, T, H, dh):
    # (B*H, T, dh) -> (B*T, H*dh)
    return x.reshape(B, H, T, dh).transpose(0, 2, 1, 3).reshape(B * T, H * dh)


def residual_block(x, xa, p, n_head):
    B, T, D = x.shape
    Ta = xa.shape[1]
    H = n_head
    dh = D // H

    # --- self attention (causal) --------------------------------------------
    xn = layer_norm(x.reshape(B * T, D), p["attn_ln_g"], p["attn_ln_b"])
    qkv = linear(xn, p["attn"]["w_qkv"], p["attn"]["b_qkv"])           # (B*T, 3D)
    qkv = qkv.reshape(B, T, 3, H, dh).transpose(2, 0, 3, 1, 4)          # (3,B,H,T,dh)
    q = qkv[0].reshape(B * H, T, dh)
    k = qkv[1].reshape(B * H, T, dh)
    v = qkv[2].reshape(B * H, T, dh)
    a = mha(q, k, v, causal=True)
    a = linear(_merge_heads(a, B, T, H, dh), p["attn"]["wo"], p["attn"]["bo"])
    x = x + a.reshape(B, T, D)

    # --- cross attention -----------------------------------------------------
    xn = layer_norm(x.reshape(B * T, D), p["cross_ln_g"], p["cross_ln_b"])
    qc = linear(xn, p["cross"]["wq"], p["cross"]["bq"])                 # (B*T, D)
    kv = linear(xa.reshape(B * Ta, D), p["cross"]["w_kv"], p["cross"]["b_kv"])
    kv = kv.reshape(B, Ta, 2, H, dh).transpose(2, 0, 3, 1, 4)           # (2,B,H,Ta,dh)
    qc = _split_heads(qc, B, T, H, dh)
    kc = kv[0].reshape(B * H, Ta, dh)
    vc = kv[1].reshape(B * H, Ta, dh)
    c = mha(qc, kc, vc, causal=False)
    c = linear(_merge_heads(c, B, T, H, dh), p["cross"]["wo"], p["cross"]["bo"])
    x = x + c.reshape(B, T, D)

    # --- MLP (bias + exact GELU fused into the first matmul epilogue) --------
    xn = layer_norm(x.reshape(B * T, D), p["mlp_ln_g"], p["mlp_ln_b"])
    h = linear(xn, p["mlp_w1"], p["mlp_b1"], activation="gelu")
    m = linear(h, p["mlp_w2"], p["mlp_b2"])
    x = x + m.reshape(B, T, D)
    return x


def text_decoder_forward(tokens, xa, params, n_head):
    """TextDecoder.forward with kv_cache=None (offset=0)."""
    B, T = tokens.shape
    V, D = params["tok_emb"].shape

    # TODO(synk): token-embedding gather + positional add, head split/merge
    # transposes, and residual adds remain plain JAX glue around the kernels.
    x = jnp.take(params["tok_emb"], tokens, axis=0) + params["pos_emb"][:T]
    x = x.astype(xa.dtype)

    for p in params["blocks"]:
        x = residual_block(x, xa, p, n_head)

    xn = layer_norm(x.reshape(B * T, D), params["ln_g"], params["ln_b"])
    # Tied-weight logits head: pre-transposed, 128-padded embedding (D, V_pad);
    # full-M row tile streams the embedding from HBM exactly once; padded
    # vocab columns are sliced off below.  Output stays float32.
    logits = linear(xn, params["tok_emb_t"], None, out_dtype=jnp.float32)
    return logits[:, :V].reshape(B, T, V)


# --------------------------------------------------------------------------
# Deterministic synthetic parameter init (bf16 weights, f32 bias / LN params)
# --------------------------------------------------------------------------

def init_params(key, n_vocab, n_ctx, n_state, n_layer, dtype=jnp.bfloat16):
    keys = iter(jax.random.split(key, 8 + n_layer * 32))
    D = n_state

    def nrm(shape, scale=0.02, dt=dtype):
        return (scale * jax.random.normal(next(keys), shape, jnp.float32)).astype(dt)

    ones = lambda n: jnp.ones((n,), jnp.float32)
    zeros = lambda n: jnp.zeros((n,), jnp.float32)

    def self_attn_params():
        wq, wk, wv = nrm((D, D)), nrm((D, D)), nrm((D, D))
        bq, bv = nrm((D,), dt=jnp.float32), nrm((D,), dt=jnp.float32)
        return {
            # key has no bias in the reference -> zero slot in the fused bias.
            "w_qkv": jnp.concatenate([wq, wk, wv], axis=1),
            "b_qkv": jnp.concatenate([bq, zeros(D), bv]).reshape(1, 3 * D),
            "wo": nrm((D, D)), "bo": nrm((1, D), dt=jnp.float32),
        }

    def cross_attn_params():
        wk, wv = nrm((D, D)), nrm((D, D))
        bv = nrm((D,), dt=jnp.float32)
        return {
            "wq": nrm((D, D)), "bq": nrm((1, D), dt=jnp.float32),
            "w_kv": jnp.concatenate([wk, wv], axis=1),
            "b_kv": jnp.concatenate([zeros(D), bv]).reshape(1, 2 * D),
            "wo": nrm((D, D)), "bo": nrm((1, D), dt=jnp.float32),
        }

    blocks = []
    for _ in range(n_layer):
        blocks.append({
            "attn": self_attn_params(),
            "attn_ln_g": ones(D), "attn_ln_b": zeros(D),
            "cross": cross_attn_params(),
            "cross_ln_g": ones(D), "cross_ln_b": zeros(D),
            "mlp_w1": nrm((D, 4 * D)), "mlp_b1": nrm((1, 4 * D), dt=jnp.float32),
            "mlp_w2": nrm((4 * D, D)), "mlp_b2": nrm((1, D), dt=jnp.float32),
            "mlp_ln_g": ones(D), "mlp_ln_b": zeros(D),
        })

    tok_emb = nrm((n_vocab, D))
    # One-time HBM prep of the tied logits weight: transpose to (D, V) and pad
    # the vocab to a multiple of 128 so the logits GEMM tiles lane-dense and
    # needs no per-tile XLU transpose.
    v_pad = ((n_vocab + 127) // 128) * 128
    tok_emb_t = jnp.zeros((D, v_pad), dtype).at[:, :n_vocab].set(tok_emb.T)

    return {
        "tok_emb": tok_emb,
        "tok_emb_t": tok_emb_t,
        "pos_emb": nrm((n_ctx, D)),
        "blocks": blocks,
        "ln_g": ones(D), "ln_b": zeros(D),
    }


# --------------------------------------------------------------------------
# Demo
# --------------------------------------------------------------------------

if __name__ == "__main__":
    n_vocab, n_ctx, n_state, n_head, n_layer = 64, 16, 32, 4, 2
    batch, seq, n_audio_ctx = 2, 8, 16

    key = jax.random.PRNGKey(0)
    k_par, k_tok, k_xa = jax.random.split(key, 3)

    params = init_params(k_par, n_vocab, n_ctx, n_state, n_layer)
    tokens = jax.random.randint(k_tok, (batch, seq), 0, n_vocab, dtype=jnp.int32)
    xa = jax.random.normal(k_xa, (batch, n_audio_ctx, n_state),
                           jnp.float32).astype(jnp.bfloat16)

    fwd = jax.jit(functools.partial(text_decoder_forward, n_head=n_head))
    logits = fwd(tokens, xa, params)
    logits = jax.block_until_ready(logits)

    assert logits.shape == (batch, seq, n_vocab)
    assert logits.dtype == jnp.float32
    assert bool(jnp.all(jnp.isfinite(logits)))
    print("KERNEL_OK")
</pallas_src>

<mosaic_0001>
module attributes {stable_mosaic.version = 11 : i64} {
  func.func @_matmul_kernel(%arg0: i32, %arg1: i32, %arg2: i32, %arg3: memref<16x32xbf16, #tpu.memory_space<vmem>>, %arg4: memref<32x96xbf16, #tpu.memory_space<vmem>>, %arg5: memref<1x96xf32, #tpu.memory_space<vmem>>, %arg6: memref<16x96xbf16, #tpu.memory_space<vmem>>) attributes {dimension_semantics = [#tpu.dimension_semantics<parallel>, #tpu.dimension_semantics<parallel>, #tpu.dimension_semantics<arbitrary>], iteration_bounds = array<i64: 1, 1, 1>, scalar_prefetch = 0 : i64, scratch_operands = 0 : i64, tpu.core_type = #tpu.core_type<tc>, window_params = [{transform_indices = @transform_0, window_bounds = array<i64: 16, 32>}, {transform_indices = @transform_1, window_bounds = array<i64: 32, 96>}, {transform_indices = @transform_2, window_bounds = array<i64: 1, 96>}, {transform_indices = @transform_3, window_bounds = array<i64: 16, 96>}]} {
    %c0 = arith.constant 0 : index
    %c0_0 = arith.constant 0 : index
    %0 = vector.load %arg3[%c0, %c0_0] : memref<16x32xbf16, #tpu.memory_space<vmem>>, vector<16x32xbf16>
    %c0_1 = arith.constant 0 : index
    %c0_2 = arith.constant 0 : index
    %1 = vector.load %arg4[%c0_1, %c0_2] : memref<32x96xbf16, #tpu.memory_space<vmem>>, vector<32x96xbf16>
    %cst = arith.constant dense<0.000000e+00> : vector<16x96xf32>
    %2 = tpu.matmul %0, %1, %cst {dimension_numbers = #tpu.dot_dimension_numbers<[1], [0], [0], [1], [0, 0, 1, 1], [], []>} : vector<16x32xbf16>, vector<32x96xbf16>, vector<16x96xf32> -> vector<16x96xf32>
    %c0_3 = arith.constant 0 : index
    %c0_4 = arith.constant 0 : index
    %3 = vector.load %arg5[%c0_3, %c0_4] : memref<1x96xf32, #tpu.memory_space<vmem>>, vector<1x96xf32>
    %4 = vector.broadcast %3 : vector<1x96xf32> to vector<16x96xf32>
    %5 = arith.addf %2, %4 : vector<16x96xf32>
    %6 = arith.truncf %5 : vector<16x96xf32> to vector<16x96xbf16>
    %c0_5 = arith.constant 0 : index
    %c0_6 = arith.constant 0 : index
    %7 = vector.load %arg6[%c0_5, %c0_6] : memref<16x96xbf16, #tpu.memory_space<vmem>>, vector<16x96xbf16>
    tpu.vector_store %arg6[%c0_5, %c0_6], %6 {strides = array<i32>} : memref<16x96xbf16, #tpu.memory_space<vmem>>, vector<16x96xbf16>,
    return
  }
  func.func @transform_0(%arg0: i32, %arg1: i32, %arg2: i32) -> (i32, i32) {
    %c0_i32 = arith.constant 0 : i32
    return %arg0, %arg2 : i32, i32
  }
  func.func @transform_1(%arg0: i32, %arg1: i32, %arg2: i32) -> (i32, i32) {
    %c0_i32 = arith.constant 0 : i32
    return %arg2, %arg1 : i32, i32
  }
  func.func @transform_2(%arg0: i32, %arg1: i32, %arg2: i32) -> (i32, i32) {
    %c0_i32 = arith.constant 0 : i32
    %c0_i32_0 = arith.constant 0 : i32
    return %c0_i32, %arg1 : i32, i32
  }
  func.func @transform_3(%arg0: i32, %arg1: i32, %arg2: i32) -> (i32, i32) {
    %c0_i32 = arith.constant 0 : i32
    return %arg0, %arg1 : i32, i32
  }
}

module attributes {stable_mosaic.version = 11 : i64} {
  func.func @_ln_kernel(%arg0: i32, %arg1: memref<16x32xbf16, #tpu.memory_space<vmem>>, %arg2: memref<1x32xf32, #tpu.memory_space<vmem>>, %arg3: memref<1x32xf32, #tpu.memory_space<vmem>>, %arg4: memref<16x32xbf16, #tpu.memory_space<vmem>>) attributes {dimension_semantics = [#tpu.dimension_semantics<parallel>], iteration_bounds = array<i64: 1>, scalar_prefetch = 0 : i64, scratch_operands = 0 : i64, tpu.core_type = #tpu.core_type<tc>, window_params = [{transform_indices = @transform_0, window_bounds = array<i64: 16, 32>}, {pipeline_mode = #tpu.pipeline_mode<synchronous>, transform_indices = @transform_1, window_bounds = array<i64: 1, 32>}, {pipeline_mode = #tpu.pipeline_mode<synchronous>, transform_indices = @transform_2, window_bounds = array<i64: 1, 32>}, {transform_indices = @transform_3, window_bounds = array<i64: 16, 32>}]} {
    %c0 = arith.constant 0 : index
    %c0_0 = arith.constant 0 : index
    %0 = vector.load %arg1[%c0, %c0_0] : memref<16x32xbf16, #tpu.memory_space<vmem>>, vector<16x32xbf16>
    %1 = arith.extf %0 : vector<16x32xbf16> to vector<16x32xf32>
    %cst = arith.constant dense<0.000000e+00> : vector<16xf32>
    %2 = vector.multi_reduction <add>, %1, %cst [1] : vector<16x32xf32> to vector<16xf32>
    %3 = vector.shape_cast %2 : vector<16xf32> to vector<16x1xf32>
    %cst_1 = arith.constant 3.200000e+01 : f32
    %4 = vector.broadcast %cst_1 : f32 to vector<16x1xf32>
    %5 = arith.divf %3, %4 : vector<16x1xf32>
    %6 = vector.broadcast %5 : vector<16x1xf32> to vector<16x32xf32>
    %7 = arith.subf %1, %6 : vector<16x32xf32>
    %8 = arith.mulf %7, %7 : vector<16x32xf32>
    %cst_2 = arith.constant dense<0.000000e+00> : vector<16xf32>
    %9 = vector.multi_reduction <add>, %8, %cst_2 [1] : vector<16x32xf32> to vector<16xf32>
    %10 = vector.shape_cast %9 : vector<16xf32> to vector<16x1xf32>
    %cst_3 = arith.constant 3.200000e+01 : f32
    %11 = vector.broadcast %cst_3 : f32 to vector<16x1xf32>
    %12 = arith.divf %10, %11 : vector<16x1xf32>
    %cst_4 = arith.constant 9.99999974E-6 : f32
    %13 = vector.broadcast %cst_4 : f32 to vector<16x1xf32>
    %14 = arith.addf %12, %13 : vector<16x1xf32>
    %15 = math.rsqrt %14 : vector<16x1xf32>
    %16 = vector.broadcast %15 : vector<16x1xf32> to vector<16x32xf32>
    %17 = arith.mulf %7, %16 : vector<16x32xf32>
    %c0_5 = arith.constant 0 : index
    %c0_6 = arith.constant 0 : index
    %18 = vector.load %arg2[%c0_5, %c0_6] : memref<1x32xf32, #tpu.memory_space<vmem>>, vector<1x32xf32>
    %19 = vector.broadcast %18 : vector<1x32xf32> to vector<16x32xf32>
    %20 = arith.mulf %17, %19 : vector<16x32xf32>
    %c0_7 = arith.constant 0 : index
    %c0_8 = arith.constant 0 : index
    %21 = vector.load %arg3[%c0_7, %c0_8] : memref<1x32xf32, #tpu.memory_space<vmem>>, vector<1x32xf32>
    %22 = vector.broadcast %21 : vector<1x32xf32> to vector<16x32xf32>
    %23 = arith.addf %20, %22 : vector<16x32xf32>
    %24 = arith.truncf %23 : vector<16x32xf32> to vector<16x32xbf16>
    %c0_9 = arith.constant 0 : index
    %c0_10 = arith.constant 0 : index
    %25 = vector.load %arg4[%c0_9, %c0_10] : memref<16x32xbf16, #tpu.memory_space<vmem>>, vector<16x32xbf16>
    tpu.vector_store %arg4[%c0_9, %c0_10], %24 {strides = array<i32>} : memref<16x32xbf16, #tpu.memory_space<vmem>>, vector<16x32xbf16>,
    return
  }
  func.func @transform_0(%arg0: i32) -> (i32, i32) {
    %c0_i32 = arith.constant 0 : i32
    %c0_i32_0 = arith.constant 0 : i32
    return %arg0, %c0_i32 : i32, i32
  }
  func.func @transform_1(%arg0: i32) -> (i32, i32) {
    %c0_i32 = arith.constant 0 : i32
    %c0_i32_0 = arith.constant 0 : i32
    %c0_i32_1 = arith.constant 0 : i32
    return %c0_i32, %c0_i32_0 : i32, i32
  }
  func.func @transform_2(%arg0: i32) -> (i32, i32) {
    %c0_i32 = arith.constant 0 : i32
    %c0_i32_0 = arith.constant 0 : i32
    %c0_i32_1 = arith.constant 0 : i32
    return %c0_i32, %c0_i32_0 : i32, i32
  }
  func.func @transform_3(%arg0: i32) -> (i32, i32) {
    %c0_i32 = arith.constant 0 : i32
    %c0_i32_0 = arith.constant 0 : i32
    return %arg0, %c0_i32 : i32, i32
  }
}

module attributes {stable_mosaic.version = 11 : i64} {
  func.func @_mha_kernel(%arg0: i32, %arg1: i32, %arg2: memref<1x8x8xbf16, #tpu.memory_space<vmem>>, %arg3: memref<1x8x8xbf16, #tpu.memory_space<vmem>>, %arg4: memref<1x8x8xbf16, #tpu.memory_space<vmem>>, %arg5: memref<1x8x8xbf16, #tpu.memory_space<vmem>>, %arg6: memref<8x1xf32, #tpu.memory_space<vmem>>, %arg7: memref<8x1xf32, #tpu.memory_space<vmem>>, %arg8: memref<8x8xf32, #tpu.memory_space<vmem>>) attributes {dimension_semantics = [#tpu.dimension_semantics<parallel>, #tpu.dimension_semantics<arbitrary>], iteration_bounds = array<i64: 8, 1>, scalar_prefetch = 0 : i64, scratch_operands = 3 : i64, tpu.core_type = #tpu.core_type<tc>, window_params = [{transform_indices = @transform_0, window_bounds = array<i64: 1, 8, 8>}, {transform_indices = @transform_1, window_bounds = array<i64: 1, 8, 8>}, {transform_indices = @transform_2, window_bounds = array<i64: 1, 8, 8>}, {transform_indices = @transform_3, window_bounds = array<i64: 1, 8, 8>}]} {
    %c0_i32 = arith.constant 0 : i32
    %0 = arith.cmpi eq, %arg1, %c0_i32 : i32
    %1 = arith.extui %0 : i1 to i32
    %c0_i32_0 = arith.constant 0 : i32
    %2 = arith.cmpi ne, %1, %c0_i32_0 : i32
    scf.if %2 {
      %cst_28 = arith.constant -1.000000e+30 : f32
      %46 = vector.broadcast %cst_28 : f32 to vector<8x1xf32>
      %c0_29 = arith.constant 0 : index
      %c0_30 = arith.constant 0 : index
      %47 = vector.load %arg6[%c0_29, %c0_30] : memref<8x1xf32, #tpu.memory_space<vmem>>, vector<8x1xf32>
      tpu.vector_store %arg6[%c0_29, %c0_30], %46 {strides = array<i32>} : memref<8x1xf32, #tpu.memory_space<vmem>>, vector<8x1xf32>,
      %cst_31 = arith.constant 0.000000e+00 : f32
      %48 = vector.broadcast %cst_31 : f32 to vector<8x1xf32>
      %c0_32 = arith.constant 0 : index
      %c0_33 = arith.constant 0 : index
      %49 = vector.load %arg7[%c0_32, %c0_33] : memref<8x1xf32, #tpu.memory_space<vmem>>, vector<8x1xf32>
      tpu.vector_store %arg7[%c0_32, %c0_33], %48 {strides = array<i32>} : memref<8x1xf32, #tpu.memory_space<vmem>>, vector<8x1xf32>,
      %cst_34 = arith.constant 0.000000e+00 : f32
      %50 = vector.broadcast %cst_34 : f32 to vector<8x8xf32>
      %c0_35 = arith.constant 0 : index
      %c0_36 = arith.constant 0 : index
      %51 = vector.load %arg8[%c0_35, %c0_36] : memref<8x8xf32, #tpu.memory_space<vmem>>, vector<8x8xf32>
      tpu.vector_store %arg8[%c0_35, %c0_36], %50 {strides = array<i32>} : memref<8x8xf32, #tpu.memory_space<vmem>>, vector<8x8xf32>,
    } else {
    }
    %c0 = arith.constant 0 : index
    %c0_1 = arith.constant 0 : index
    %c0_2 = arith.constant 0 : index
    %3 = vector.load %arg2[%c0, %c0_1, %c0_2] : memref<1x8x8xbf16, #tpu.memory_space<vmem>>, vector<1x8x8xbf16>
    %4 = vector.shape_cast %3 : vector<1x8x8xbf16> to vector<8x8xbf16>
    %c0_3 = arith.constant 0 : index
    %c0_4 = arith.constant 0 : index
    %c0_5 = arith.constant 0 : index
    %5 = vector.load %arg3[%c0_3, %c0_4, %c0_5] : memref<1x8x8xbf16, #tpu.memory_space<vmem>>, vector<1x8x8xbf16>
    %6 = vector.shape_cast %5 : vector<1x8x8xbf16> to vector<8x8xbf16>
    %c0_6 = arith.constant 0 : index
    %c0_7 = arith.constant 0 : index
    %c0_8 = arith.constant 0 : index
    %7 = vector.load %arg4[%c0_6, %c0_7, %c0_8] : memref<1x8x8xbf16, #tpu.memory_space<vmem>>, vector<1x8x8xbf16>
    %8 = vector.shape_cast %7 : vector<1x8x8xbf16> to vector<8x8xbf16>
    %cst = arith.constant dense<0.000000e+00> : vector<8x8xf32>
    %9 = tpu.matmul %4, %6, %cst {dimension_numbers = #tpu.dot_dimension_numbers<[1], [1], [0], [0], [0, 0, 1, 0], [], []>} : vector<8x8xbf16>, vector<8x8xbf16>, vector<8x8xf32> -> vector<8x8xf32>
    %cst_9 = arith.constant 0.353553385 : f32
    %10 = vector.broadcast %cst_9 : f32 to vector<8x8xf32>
    %11 = arith.mulf %9, %10 : vector<8x8xf32>
    %c8_i32 = arith.constant 8 : i32
    %12 = arith.muli %arg1, %c8_i32 : i32
    %13 = tpu.iota {dimensions = array<i32: 1>} : vector<8x8xi32>
    %14 = vector.broadcast %12 : i32 to vector<8x8xi32>
    %15 = arith.addi %14, %13 : vector<8x8xi32>
    %16 = tpu.iota {dimensions = array<i32: 0>} : vector<8x8xi32>
    %17 = arith.cmpi sgt, %15, %16 : vector<8x8xi32>
    %cst_10 = arith.constant 0xFF800000 : f32
    %18 = vector.broadcast %cst_10 : f32 to vector<8x8xf32>
    %19 = arith.select %17, %18, %11 : vector<8x8xi1>, vector<8x8xf32>
    %c0_11 = arith.constant 0 : index
    %c0_12 = arith.constant 0 : index
    %20 = vector.load %arg6[%c0_11, %c0_12] : memref<8x1xf32, #tpu.memory_space<vmem>>, vector<8x1xf32>
    %cst_13 = arith.constant dense<0xFF800000> : vector<8xf32>
    %21 = vector.multi_reduction <maximumf>, %19, %cst_13 [1] : vector<8x8xf32> to vector<8xf32>
    %22 = vector.shape_cast %21 : vector<8xf32> to vector<8x1xf32>
    %23 = arith.maximumf %20, %22 : vector<8x1xf32>
    %24 = arith.subf %20, %23 : vector<8x1xf32>
    %25 = math.exp %24 : vector<8x1xf32>
    %26 = vector.broadcast %23 : vector<8x1xf32> to vector<8x8xf32>
    %27 = arith.subf %19, %26 : vector<8x8xf32>
    %28 = math.exp %27 : vector<8x8xf32>
    %c0_14 = arith.constant 0 : index
    %c0_15 = arith.constant 0 : index
    %29 = vector.load %arg7[%c0_14, %c0_15] : memref<8x1xf32, #tpu.memory_space<vmem>>, vector<8x1xf32>
    %30 = arith.mulf %25, %29 : vector<8x1xf32>
    %cst_16 = arith.constant dense<0.000000e+00> : vector<8xf32>
    %31 = vector.multi_reduction <add>, %28, %cst_16 [1] : vector<8x8xf32> to vector<8xf32>
    %32 = vector.shape_cast %31 : vector<8xf32> to vector<8x1xf32>
    %33 = arith.addf %30, %32 : vector<8x1xf32>
    %c0_17 = arith.constant 0 : index
    %c0_18 = arith.constant 0 : index
    %34 = vector.load %arg7[%c0_17, %c0_18] : memref<8x1xf32, #tpu.memory_space<vmem>>, vector<8x1xf32>
    tpu.vector_store %arg7[%c0_17, %c0_18], %33 {strides = array<i32>} : memref<8x1xf32, #tpu.memory_space<vmem>>, vector<8x1xf32>,
    %c0_19 = arith.constant 0 : index
    %c0_20 = arith.constant 0 : index
    %35 = vector.load %arg8[%c0_19, %c0_20] : memref<8x8xf32, #tpu.memory_space<vmem>>, vector<8x8xf32>
    %36 = vector.broadcast %25 : vector<8x1xf32> to vector<8x8xf32>
    %37 = arith.mulf %36, %35 : vector<8x8xf32>
    %38 = arith.truncf %28 : vector<8x8xf32> to vector<8x8xbf16>
    %cst_21 = arith.constant dense<0.000000e+00> : vector<8x8xf32>
    %39 = tpu.matmul %38, %8, %cst_21 {dimension_numbers = #tpu.dot_dimension_numbers<[1], [0], [0], [1], [0, 0, 1, 1], [], []>} : vector<8x8xbf16>, vector<8x8xbf16>, vector<8x8xf32> -> vector<8x8xf32>
    %40 = arith.addf %37, %39 : vector<8x8xf32>
    %c0_22 = arith.constant 0 : index
    %c0_23 = arith.constant 0 : index
    %41 = vector.load %arg8[%c0_22, %c0_23] : memref<8x8xf32, #tpu.memory_space<vmem>>, vector<8x8xf32>
    tpu.vector_store %arg8[%c0_22, %c0_23], %40 {strides = array<i32>} : memref<8x8xf32, #tpu.memory_space<vmem>>, vector<8x8xf32>,
    %c0_24 = arith.constant 0 : index
    %c0_25 = arith.constant 0 : index
    %42 = vector.load %arg6[%c0_24, %c0_25] : memref<8x1xf32, #tpu.memory_space<vmem>>, vector<8x1xf32>
    tpu.vector_store %arg6[%c0_24, %c0_25], %23 {strides = array<i32>} : memref<8x1xf32, #tpu.memory_space<vmem>>, vector<8x1xf32>,
    %c0_i32_26 = arith.constant 0 : i32
    %43 = arith.cmpi eq, %arg1, %c0_i32_26 : i32
    %44 = arith.extui %43 : i1 to i32
    %c0_i32_27 = arith.constant 0 : i32
    %45 = arith.cmpi ne, %44, %c0_i32_27 : i32
    scf.if %45 {
      %c0_28 = arith.constant 0 : index
      %c0_29 = arith.constant 0 : index
      %46 = vector.load %arg8[%c0_28, %c0_29] : memref<8x8xf32, #tpu.memory_space<vmem>>, vector<8x8xf32>
      %c0_30 = arith.constant 0 : index
      %c0_31 = arith.constant 0 : index
      %47 = vector.load %arg7[%c0_30, %c0_31] : memref<8x1xf32, #tpu.memory_space<vmem>>, vector<8x1xf32>
      %48 = tpu.reciprocal %47 {approx = true} : vector<8x1xf32> -> vector<8x1xf32>
      %49 = vector.broadcast %48 : vector<8x1xf32> to vector<8x8xf32>
      %50 = arith.mulf %46, %49 : vector<8x8xf32>
      %51 = arith.truncf %50 : vector<8x8xf32> to vector<8x8xbf16>
      %c0_32 = arith.constant 0 : index
      %c0_33 = arith.constant 0 : index
      %c0_34 = arith.constant 0 : index
      %52 = vector.load %arg5[%c0_32, %c0_33, %c0_34] : memref<1x8x8xbf16, #tpu.memory_space<vmem>>, vector<1x8x8xbf16>
      %53 = vector.shape_cast %52 : vector<1x8x8xbf16> to vector<8x8xbf16>
      %54 = vector.shape_cast %51 : vector<8x8xbf16> to vector<1x8x8xbf16>
      tpu.vector_store %arg5[%c0_32, %c0_33, %c0_34], %54 {strides = array<i32>} : memref<1x8x8xbf16, #tpu.memory_space<vmem>>, vector<1x8x8xbf16>,
    } else {
    }
    return
  }
  func.func @transform_0(%arg0: i32, %arg1: i32) -> (i32, i32, i32) {
    %c0_i32 = arith.constant 0 : i32
    %c0_i32_0 = arith.constant 0 : i32
    %c0_i32_1 = arith.constant 0 : i32
    return %arg0, %c0_i32, %c0_i32_0 : i32, i32, i32
  }
  func.func @transform_1(%arg0: i32, %arg1: i32) -> (i32, i32, i32) {
    %c0_i32 = arith.constant 0 : i32
    %c0_i32_0 = arith.constant 0 : i32
    return %arg0, %arg1, %c0_i32 : i32, i32, i32
  }
  func.func @transform_2(%arg0: i32, %arg1: i32) -> (i32, i32, i32) {
    %c0_i32 = arith.constant 0 : i32
    %c0_i32_0 = arith.constant 0 : i32
    return %arg0, %arg1, %c0_i32 : i32, i32, i32
  }
  func.func @transform_3(%arg0: i32, %arg1: i32) -> (i32, i32, i32) {
    %c0_i32 = arith.constant 0 : i32
    %c0_i32_0 = arith.constant 0 : i32
    %c0_i32_1 = arith.constant 0 : i32
    return %arg0, %c0_i32, %c0_i32_0 : i32, i32, i32
  }
}

module attributes {stable_mosaic.version = 11 : i64} {
  func.func @_matmul_kernel(%arg0: i32, %arg1: i32, %arg2: i32, %arg3: memref<16x32xbf16, #tpu.memory_space<vmem>>, %arg4: memref<32x32xbf16, #tpu.memory_space<vmem>>, %arg5: memref<1x32xf32, #tpu.memory_space<vmem>>, %arg6: memref<16x32xbf16, #tpu.memory_space<vmem>>) attributes {dimension_semantics = [#tpu.dimension_semantics<parallel>, #tpu.dimension_semantics<parallel>, #tpu.dimension_semantics<arbitrary>], iteration_bounds = array<i64: 1, 1, 1>, scalar_prefetch = 0 : i64, scratch_operands = 0 : i64, tpu.core_type = #tpu.core_type<tc>, window_params = [{transform_indices = @transform_0, window_bounds = array<i64: 16, 32>}, {transform_indices = @transform_1, window_bounds = array<i64: 32, 32>}, {transform_indices = @transform_2, window_bounds = array<i64: 1, 32>}, {transform_indices = @transform_3, window_bounds = array<i64: 16, 32>}]} {
    %c0 = arith.constant 0 : index
    %c0_0 = arith.constant 0 : index
    %0 = vector.load %arg3[%c0, %c0_0] : memref<16x32xbf16, #tpu.memory_space<vmem>>, vector<16x32xbf16>
    %c0_1 = arith.constant 0 : index
    %c0_2 = arith.constant 0 : index
    %1 = vector.load %arg4[%c0_1, %c0_2] : memref<32x32xbf16, #tpu.memory_space<vmem>>, vector<32x32xbf16>
    %cst = arith.constant dense<0.000000e+00> : vector<16x32xf32>
    %2 = tpu.matmul %0, %1, %cst {dimension_numbers = #tpu.dot_dimension_numbers<[1], [0], [0], [1], [0, 0, 1, 1], [], []>} : vector<16x32xbf16>, vector<32x32xbf16>, vector<16x32xf32> -> vector<16x32xf32>
    %c0_3 = arith.constant 0 : index
    %c0_4 = arith.constant 0 : index
    %3 = vector.load %arg5[%c0_3, %c0_4] : memref<1x32xf32, #tpu.memory_space<vmem>>, vector<1x32xf32>
    %4 = vector.broadcast %3 : vector<1x32xf32> to vector<16x32xf32>
    %5 = arith.addf %2, %4 : vector<16x32xf32>
    %6 = arith.truncf %5 : vector<16x32xf32> to vector<16x32xbf16>
    %c0_5 = arith.constant 0 : index
    %c0_6 = arith.constant 0 : index
    %7 = vector.load %arg6[%c0_5, %c0_6] : memref<16x32xbf16, #tpu.memory_space<vmem>>, vector<16x32xbf16>
    tpu.vector_store %arg6[%c0_5, %c0_6], %6 {strides = array<i32>} : memref<16x32xbf16, #tpu.memory_space<vmem>>, vector<16x32xbf16>,
    return
  }
  func.func @transform_0(%arg0: i32, %arg1: i32, %arg2: i32) -> (i32, i32) {
    %c0_i32 = arith.constant 0 : i32
    return %arg0, %arg2 : i32, i32
  }
  func.func @transform_1(%arg0: i32, %arg1: i32, %arg2: i32) -> (i32, i32) {
    %c0_i32 = arith.constant 0 : i32
    return %arg2, %arg1 : i32, i32
  }
  func.func @transform_2(%arg0: i32, %arg1: i32, %arg2: i32) -> (i32, i32) {
    %c0_i32 = arith.constant 0 : i32
    %c0_i32_0 = arith.constant 0 : i32
    return %c0_i32, %arg1 : i32, i32
  }
  func.func @transform_3(%arg0: i32, %arg1: i32, %arg2: i32) -> (i32, i32) {
    %c0_i32 = arith.constant 0 : i32
    return %arg0, %arg1 : i32, i32
  }
}

module attributes {stable_mosaic.version = 11 : i64} {
  func.func @_mha_kernel(%arg0: i32, %arg1: i32, %arg2: memref<1x8x8xbf16, #tpu.memory_space<vmem>>, %arg3: memref<1x16x8xbf16, #tpu.memory_space<vmem>>, %arg4: memref<1x16x8xbf16, #tpu.memory_space<vmem>>, %arg5: memref<1x8x8xbf16, #tpu.memory_space<vmem>>, %arg6: memref<8x1xf32, #tpu.memory_space<vmem>>, %arg7: memref<8x1xf32, #tpu.memory_space<vmem>>, %arg8: memref<8x8xf32, #tpu.memory_space<vmem>>) attributes {dimension_semantics = [#tpu.dimension_semantics<parallel>, #tpu.dimension_semantics<arbitrary>], iteration_bounds = array<i64: 8, 1>, scalar_prefetch = 0 : i64, scratch_operands = 3 : i64, tpu.core_type = #tpu.core_type<tc>, window_params = [{transform_indices = @transform_0, window_bounds = array<i64: 1, 8, 8>}, {transform_indices = @transform_1, window_bounds = array<i64: 1, 16, 8>}, {transform_indices = @transform_2, window_bounds = array<i64: 1, 16, 8>}, {transform_indices = @transform_3, window_bounds = array<i64: 1, 8, 8>}]} {
    %c0_i32 = arith.constant 0 : i32
    %0 = arith.cmpi eq, %arg1, %c0_i32 : i32
    %1 = arith.extui %0 : i1 to i32
    %c0_i32_0 = arith.constant 0 : i32
    %2 = arith.cmpi ne, %1, %c0_i32_0 : i32
    scf.if %2 {
      %cst_27 = arith.constant -1.000000e+30 : f32
      %38 = vector.broadcast %cst_27 : f32 to vector<8x1xf32>
      %c0_28 = arith.constant 0 : index
      %c0_29 = arith.constant 0 : index
      %39 = vector.load %arg6[%c0_28, %c0_29] : memref<8x1xf32, #tpu.memory_space<vmem>>, vector<8x1xf32>
      tpu.vector_store %arg6[%c0_28, %c0_29], %38 {strides = array<i32>} : memref<8x1xf32, #tpu.memory_space<vmem>>, vector<8x1xf32>,
      %cst_30 = arith.constant 0.000000e+00 : f32
      %40 = vector.broadcast %cst_30 : f32 to vector<8x1xf32>
      %c0_31 = arith.constant 0 : index
      %c0_32 = arith.constant 0 : index
      %41 = vector.load %arg7[%c0_31, %c0_32] : memref<8x1xf32, #tpu.memory_space<vmem>>, vector<8x1xf32>
      tpu.vector_store %arg7[%c0_31, %c0_32], %40 {strides = array<i32>} : memref<8x1xf32, #tpu.memory_space<vmem>>, vector<8x1xf32>,
      %cst_33 = arith.constant 0.000000e+00 : f32
      %42 = vector.broadcast %cst_33 : f32 to vector<8x8xf32>
      %c0_34 = arith.constant 0 : index
      %c0_35 = arith.constant 0 : index
      %43 = vector.load %arg8[%c0_34, %c0_35] : memref<8x8xf32, #tpu.memory_space<vmem>>, vector<8x8xf32>
      tpu.vector_store %arg8[%c0_34, %c0_35], %42 {strides = array<i32>} : memref<8x8xf32, #tpu.memory_space<vmem>>, vector<8x8xf32>,
    } else {
    }
    %c0 = arith.constant 0 : index
    %c0_1 = arith.constant 0 : index
    %c0_2 = arith.constant 0 : index
    %3 = vector.load %arg2[%c0, %c0_1, %c0_2] : memref<1x8x8xbf16, #tpu.memory_space<vmem>>, vector<1x8x8xbf16>
    %4 = vector.shape_cast %3 : vector<1x8x8xbf16> to vector<8x8xbf16>
    %c0_3 = arith.constant 0 : index
    %c0_4 = arith.constant 0 : index
    %c0_5 = arith.constant 0 : index
    %5 = vector.load %arg3[%c0_3, %c0_4, %c0_5] : memref<1x16x8xbf16, #tpu.memory_space<vmem>>, vector<1x16x8xbf16>
    %6 = vector.shape_cast %5 : vector<1x16x8xbf16> to vector<16x8xbf16>
    %c0_6 = arith.constant 0 : index
    %c0_7 = arith.constant 0 : index
    %c0_8 = arith.constant 0 : index
    %7 = vector.load %arg4[%c0_6, %c0_7, %c0_8] : memref<1x16x8xbf16, #tpu.memory_space<vmem>>, vector<1x16x8xbf16>
    %8 = vector.shape_cast %7 : vector<1x16x8xbf16> to vector<16x8xbf16>
    %cst = arith.constant dense<0.000000e+00> : vector<8x16xf32>
    %9 = tpu.matmul %4, %6, %cst {dimension_numbers = #tpu.dot_dimension_numbers<[1], [1], [0], [0], [0, 0, 1, 0], [], []>} : vector<8x8xbf16>, vector<16x8xbf16>, vector<8x16xf32> -> vector<8x16xf32>
    %cst_9 = arith.constant 0.353553385 : f32
    %10 = vector.broadcast %cst_9 : f32 to vector<8x16xf32>
    %11 = arith.mulf %9, %10 : vector<8x16xf32>
    %c0_10 = arith.constant 0 : index
    %c0_11 = arith.constant 0 : index
    %12 = vector.load %arg6[%c0_10, %c0_11] : memref<8x1xf32, #tpu.memory_space<vmem>>, vector<8x1xf32>
    %cst_12 = arith.constant dense<0xFF800000> : vector<8xf32>
    %13 = vector.multi_reduction <maximumf>, %11, %cst_12 [1] : vector<8x16xf32> to vector<8xf32>
    %14 = vector.shape_cast %13 : vector<8xf32> to vector<8x1xf32>
    %15 = arith.maximumf %12, %14 : vector<8x1xf32>
    %16 = arith.subf %12, %15 : vector<8x1xf32>
    %17 = math.exp %16 : vector<8x1xf32>
    %18 = vector.broadcast %15 : vector<8x1xf32> to vector<8x16xf32>
    %19 = arith.subf %11, %18 : vector<8x16xf32>
    %20 = math.exp %19 : vector<8x16xf32>
    %c0_13 = arith.constant 0 : index
    %c0_14 = arith.constant 0 : index
    %21 = vector.load %arg7[%c0_13, %c0_14] : memref<8x1xf32, #tpu.memory_space<vmem>>, vector<8x1xf32>
    %22 = arith.mulf %17, %21 : vector<8x1xf32>
    %cst_15 = arith.constant dense<0.000000e+00> : vector<8xf32>
    %23 = vector.multi_reduction <add>, %20, %cst_15 [1] : vector<8x16xf32> to vector<8xf32>
    %24 = vector.shape_cast %23 : vector<8xf32> to vector<8x1xf32>
    %25 = arith.addf %22, %24 : vector<8x1xf32>
    %c0_16 = arith.constant 0 : index
    %c0_17 = arith.constant 0 : index
    %26 = vector.load %arg7[%c0_16, %c0_17] : memref<8x1xf32, #tpu.memory_space<vmem>>, vector<8x1xf32>
    tpu.vector_store %arg7[%c0_16, %c0_17], %25 {strides = array<i32>} : memref<8x1xf32, #tpu.memory_space<vmem>>, vector<8x1xf32>,
    %c0_18 = arith.constant 0 : index
    %c0_19 = arith.constant 0 : index
    %27 = vector.load %arg8[%c0_18, %c0_19] : memref<8x8xf32, #tpu.memory_space<vmem>>, vector<8x8xf32>
    %28 = vector.broadcast %17 : vector<8x1xf32> to vector<8x8xf32>
    %29 = arith.mulf %28, %27 : vector<8x8xf32>
    %30 = arith.truncf %20 : vector<8x16xf32> to vector<8x16xbf16>
    %cst_20 = arith.constant dense<0.000000e+00> : vector<8x8xf32>
    %31 = tpu.matmul %30, %8, %cst_20 {dimension_numbers = #tpu.dot_dimension_numbers<[1], [0], [0], [1], [0, 0, 1, 1], [], []>} : vector<8x16xbf16>, vector<16x8xbf16>, vector<8x8xf32> -> vector<8x8xf32>
    %32 = arith.addf %29, %31 : vector<8x8xf32>
    %c0_21 = arith.constant 0 : index
    %c0_22 = arith.constant 0 : index
    %33 = vector.load %arg8[%c0_21, %c0_22] : memref<8x8xf32, #tpu.memory_space<vmem>>, vector<8x8xf32>
    tpu.vector_store %arg8[%c0_21, %c0_22], %32 {strides = array<i32>} : memref<8x8xf32, #tpu.memory_space<vmem>>, vector<8x8xf32>,
    %c0_23 = arith.constant 0 : index
    %c0_24 = arith.constant 0 : index
    %34 = vector.load %arg6[%c0_23, %c0_24] : memref<8x1xf32, #tpu.memory_space<vmem>>, vector<8x1xf32>
    tpu.vector_store %arg6[%c0_23, %c0_24], %15 {strides = array<i32>} : memref<8x1xf32, #tpu.memory_space<vmem>>, vector<8x1xf32>,
    %c0_i32_25 = arith.constant 0 : i32
    %35 = arith.cmpi eq, %arg1, %c0_i32_25 : i32
    %36 = arith.extui %35 : i1 to i32
    %c0_i32_26 = arith.constant 0 : i32
    %37 = arith.cmpi ne, %36, %c0_i32_26 : i32
    scf.if %37 {
      %c0_27 = arith.constant 0 : index
      %c0_28 = arith.constant 0 : index
      %38 = vector.load %arg8[%c0_27, %c0_28] : memref<8x8xf32, #tpu.memory_space<vmem>>, vector<8x8xf32>
      %c0_29 = arith.constant 0 : index
      %c0_30 = arith.constant 0 : index
      %39 = vector.load %arg7[%c0_29, %c0_30] : memref<8x1xf32, #tpu.memory_space<vmem>>, vector<8x1xf32>
      %40 = tpu.reciprocal %39 {approx = true} : vector<8x1xf32> -> vector<8x1xf32>
      %41 = vector.broadcast %40 : vector<8x1xf32> to vector<8x8xf32>
      %42 = arith.mulf %38, %41 : vector<8x8xf32>
      %43 = arith.truncf %42 : vector<8x8xf32> to vector<8x8xbf16>
      %c0_31 = arith.constant 0 : index
      %c0_32 = arith.constant 0 : index
      %c0_33 = arith.constant 0 : index
      %44 = vector.load %arg5[%c0_31, %c0_32, %c0_33] : memref<1x8x8xbf16, #tpu.memory_space<vmem>>, vector<1x8x8xbf16>
      %45 = vector.shape_cast %44 : vector<1x8x8xbf16> to vector<8x8xbf16>
      %46 = vector.shape_cast %43 : vector<8x8xbf16> to vector<1x8x8xbf16>
      tpu.vector_store %arg5[%c0_31, %c0_32, %c0_33], %46 {strides = array<i32>} : memref<1x8x8xbf16, #tpu.memory_space<vmem>>, vector<1x8x8xbf16>,
    } else {
    }
    return
  }
  func.func @transform_0(%arg0: i32, %arg1: i32) -> (i32, i32, i32) {
    %c0_i32 = arith.constant 0 : i32
    %c0_i32_0 = arith.constant 0 : i32
    %c0_i32_1 = arith.constant 0 : i32
    return %arg0, %c0_i32, %c0_i32_0 : i32, i32, i32
  }
  func.func @transform_1(%arg0: i32, %arg1: i32) -> (i32, i32, i32) {
    %c0_i32 = arith.constant 0 : i32
    %c0_i32_0 = arith.constant 0 : i32
    return %arg0, %arg1, %c0_i32 : i32, i32, i32
  }
  func.func @transform_2(%arg0: i32, %arg1: i32) -> (i32, i32, i32) {
    %c0_i32 = arith.constant 0 : i32
    %c0_i32_0 = arith.constant 0 : i32
    return %arg0, %arg1, %c0_i32 : i32, i32, i32
  }
  func.func @transform_3(%arg0: i32, %arg1: i32) -> (i32, i32, i32) {
    %c0_i32 = arith.constant 0 : i32
    %c0_i32_0 = arith.constant 0 : i32
    %c0_i32_1 = arith.constant 0 : i32
    return %arg0, %c0_i32, %c0_i32_0 : i32, i32, i32
  }
}

module attributes {stable_mosaic.version = 11 : i64} {
  func.func @_matmul_kernel(%arg0: i32, %arg1: i32, %arg2: i32, %arg3: memref<16x32xbf16, #tpu.memory_space<vmem>>, %arg4: memref<32x128xbf16, #tpu.memory_space<vmem>>, %arg5: memref<1x128xf32, #tpu.memory_space<vmem>>, %arg6: memref<16x128xbf16, #tpu.memory_space<vmem>>) attributes {dimension_semantics = [#tpu.dimension_semantics<parallel>, #tpu.dimension_semantics<parallel>, #tpu.dimension_semantics<arbitrary>], iteration_bounds = array<i64: 1, 1, 1>, scalar_prefetch = 0 : i64, scratch_operands = 0 : i64, tpu.core_type = #tpu.core_type<tc>, window_params = [{transform_indices = @transform_0, window_bounds = array<i64: 16, 32>}, {transform_indices = @transform_1, window_bounds = array<i64: 32, 128>}, {transform_indices = @transform_2, window_bounds = array<i64: 1, 128>}, {transform_indices = @transform_3, window_bounds = array<i64: 16, 128>}]} {
    %c0 = arith.constant 0 : index
    %c0_0 = arith.constant 0 : index
    %0 = vector.load %arg3[%c0, %c0_0] : memref<16x32xbf16, #tpu.memory_space<vmem>>, vector<16x32xbf16>
    %c0_1 = arith.constant 0 : index
    %c0_2 = arith.constant 0 : index
    %1 = vector.load %arg4[%c0_1, %c0_2] : memref<32x128xbf16, #tpu.memory_space<vmem>>, vector<32x128xbf16>
    %cst = arith.constant dense<0.000000e+00> : vector<16x128xf32>
    %2 = tpu.matmul %0, %1, %cst {dimension_numbers = #tpu.dot_dimension_numbers<[1], [0], [0], [1], [0, 0, 1, 1], [], []>} : vector<16x32xbf16>, vector<32x128xbf16>, vector<16x128xf32> -> vector<16x128xf32>
    %c0_3 = arith.constant 0 : index
    %c0_4 = arith.constant 0 : index
    %3 = vector.load %arg5[%c0_3, %c0_4] : memref<1x128xf32, #tpu.memory_space<vmem>>, vector<1x128xf32>
    %4 = vector.broadcast %3 : vector<1x128xf32> to vector<16x128xf32>
    %5 = arith.addf %2, %4 : vector<16x128xf32>
    %cst_5 = arith.constant 5.000000e-01 : f32
    %6 = vector.broadcast %cst_5 : f32 to vector<16x128xf32>
    %7 = arith.mulf %6, %5 : vector<16x128xf32>
    %cst_6 = arith.constant 0.707106769 : f32
    %8 = vector.broadcast %cst_6 : f32 to vector<16x128xf32>
    %9 = arith.mulf %5, %8 : vector<16x128xf32>
    %cst_7 = arith.constant 0.000000e+00 : f32
    %10 = vector.broadcast %cst_7 : f32 to vector<16x128xf32>
    %11 = arith.cmpf oge, %9, %10 : vector<16x128xf32>
    %cst_8 = arith.constant 1.000000e+00 : f32
    %cst_9 = arith.constant -1.000000e+00 : f32
    %12 = vector.broadcast %cst_8 : f32 to vector<16x128xf32>
    %13 = vector.broadcast %cst_9 : f32 to vector<16x128xf32>
    %14 = arith.select %11, %12, %13 : vector<16x128xi1>, vector<16x128xf32>
    %15 = math.absf %9 : vector<16x128xf32>
    %cst_10 = arith.constant 0.327591091 : f32
    %16 = vector.broadcast %cst_10 : f32 to vector<16x128xf32>
    %17 = arith.mulf %16, %15 : vector<16x128xf32>
    %cst_11 = arith.constant 1.000000e+00 : f32
    %18 = vector.broadcast %cst_11 : f32 to vector<16x128xf32>
    %19 = arith.addf %18, %17 : vector<16x128xf32>
    %cst_12 = arith.constant 1.000000e+00 : f32
    %20 = vector.broadcast %cst_12 : f32 to vector<16x128xf32>
    %21 = arith.divf %20, %19 : vector<16x128xf32>
    %cst_13 = arith.constant 1.06140542 : f32
    %22 = vector.broadcast %cst_13 : f32 to vector<16x128xf32>
    %23 = arith.mulf %22, %21 : vector<16x128xf32>
    %cst_14 = arith.constant -1.45315206 : f32
    %24 = vector.broadcast %cst_14 : f32 to vector<16x128xf32>
    %25 = arith.addf %23, %24 : vector<16x128xf32>
    %26 = arith.mulf %25, %21 : vector<16x128xf32>
    %cst_15 = arith.constant 1.42141378 : f32
    %27 = vector.broadcast %cst_15 : f32 to vector<16x128xf32>
    %28 = arith.addf %26, %27 : vector<16x128xf32>
    %29 = arith.mulf %28, %21 : vector<16x128xf32>
    %cst_16 = arith.constant -0.284496725 : f32
    %30 = vector.broadcast %cst_16 : f32 to vector<16x128xf32>
    %31 = arith.addf %29, %30 : vector<16x128xf32>
    %32 = arith.mulf %31, %21 : vector<16x128xf32>
    %cst_17 = arith.constant 0.254829586 : f32
    %33 = vector.broadcast %cst_17 : f32 to vector<16x128xf32>
    %34 = arith.addf %32, %33 : vector<16x128xf32>
    %35 = arith.mulf %34, %21 : vector<16x128xf32>
    %cst_18 = arith.constant 0.000000e+00 : f32
    %36 = vector.broadcast %cst_18 : f32 to vector<16x128xf32>
    %37 = arith.subf %36, %15 : vector<16x128xf32>
    %38 = arith.mulf %37, %15 : vector<16x128xf32>
    %39 = math.exp %38 : vector<16x128xf32>
    %40 = arith.mulf %35, %39 : vector<16x128xf32>
    %cst_19 = arith.constant 1.000000e+00 : f32
    %41 = vector.broadcast %cst_19 : f32 to vector<16x128xf32>
    %42 = arith.subf %41, %40 : vector<16x128xf32>
    %43 = arith.mulf %14, %42 : vector<16x128xf32>
    %cst_20 = arith.constant 1.000000e+00 : f32
    %44 = vector.broadcast %cst_20 : f32 to vector<16x128xf32>
    %45 = arith.addf %44, %43 : vector<16x128xf32>
    %46 = arith.mulf %7, %45 : vector<16x128xf32>
    %47 = arith.truncf %46 : vector<16x128xf32> to vector<16x128xbf16>
    %c0_21 = arith.constant 0 : index
    %c0_22 = arith.constant 0 : index
    %48 = vector.load %arg6[%c0_21, %c0_22] : memref<16x128xbf16, #tpu.memory_space<vmem>>, vector<16x128xbf16>
    tpu.vector_store %arg6[%c0_21, %c0_22], %47 {strides = array<i32>} : memref<16x128xbf16, #tpu.memory_space<vmem>>, vector<16x128xbf16>,
    return
  }
  func.func @transform_0(%arg0: i32, %arg1: i32, %arg2: i32) -> (i32, i32) {
    %c0_i32 = arith.constant 0 : i32
    return %arg0, %arg2 : i32, i32
  }
  func.func @transform_1(%arg0: i32, %arg1: i32, %arg2: i32) -> (i32, i32) {
    %c0_i32 = arith.constant 0 : i32
    return %arg2, %arg1 : i32, i32
  }
  func.func @transform_2(%arg0: i32, %arg1: i32, %arg2: i32) -> (i32, i32) {
    %c0_i32 = arith.constant 0 : i32
    %c0_i32_0 = arith.constant 0 : i32
    return %c0_i32, %arg1 : i32, i32
  }
  func.func @transform_3(%arg0: i32, %arg1: i32, %arg2: i32) -> (i32, i32) {
    %c0_i32 = arith.constant 0 : i32
    return %arg0, %arg1 : i32, i32
  }
}

module attributes {stable_mosaic.version = 11 : i64} {
  func.func @_matmul_kernel(%arg0: i32, %arg1: i32, %arg2: i32, %arg3: memref<32x32xbf16, #tpu.memory_space<vmem>>, %arg4: memref<32x64xbf16, #tpu.memory_space<vmem>>, %arg5: memref<1x64xf32, #tpu.memory_space<vmem>>, %arg6: memref<32x64xbf16, #tpu.memory_space<vmem>>) attributes {dimension_semantics = [#tpu.dimension_semantics<parallel>, #tpu.dimension_semantics<parallel>, #tpu.dimension_semantics<arbitrary>], iteration_bounds = array<i64: 1, 1, 1>, scalar_prefetch = 0 : i64, scratch_operands = 0 : i64, tpu.core_type = #tpu.core_type<tc>, window_params = [{transform_indices = @transform_0, window_bounds = array<i64: 32, 32>}, {transform_indices = @transform_1, window_bounds = array<i64: 32, 64>}, {transform_indices = @transform_2, window_bounds = array<i64: 1, 64>}, {transform_indices = @transform_3, window_bounds = array<i64: 32, 64>}]} {
    %c0 = arith.constant 0 : index
    %c0_0 = arith.constant 0 : index
    %0 = vector.load %arg3[%c0, %c0_0] : memref<32x32xbf16, #tpu.memory_space<vmem>>, vector<32x32xbf16>
    %c0_1 = arith.constant 0 : index
    %c0_2 = arith.constant 0 : index
    %1 = vector.load %arg4[%c0_1, %c0_2] : memref<32x64xbf16, #tpu.memory_space<vmem>>, vector<32x64xbf16>
    %cst = arith.constant dense<0.000000e+00> : vector<32x64xf32>
    %2 = tpu.matmul %0, %1, %cst {dimension_numbers = #tpu.dot_dimension_numbers<[1], [0], [0], [1], [0, 0, 1, 1], [], []>} : vector<32x32xbf16>, vector<32x64xbf16>, vector<32x64xf32> -> vector<32x64xf32>
    %c0_3 = arith.constant 0 : index
    %c0_4 = arith.constant 0 : index
    %3 = vector.load %arg5[%c0_3, %c0_4] : memref<1x64xf32, #tpu.memory_space<vmem>>, vector<1x64xf32>
    %4 = vector.broadcast %3 : vector<1x64xf32> to vector<32x64xf32>
    %5 = arith.addf %2, %4 : vector<32x64xf32>
    %6 = arith.truncf %5 : vector<32x64xf32> to vector<32x64xbf16>
    %c0_5 = arith.constant 0 : index
    %c0_6 = arith.constant 0 : index
    %7 = vector.load %arg6[%c0_5, %c0_6] : memref<32x64xbf16, #tpu.memory_space<vmem>>, vector<32x64xbf16>
    tpu.vector_store %arg6[%c0_5, %c0_6], %6 {strides = array<i32>} : memref<32x64xbf16, #tpu.memory_space<vmem>>, vector<32x64xbf16>,
    return
  }
  func.func @transform_0(%arg0: i32, %arg1: i32, %arg2: i32) -> (i32, i32) {
    %c0_i32 = arith.constant 0 : i32
    return %arg0, %arg2 : i32, i32
  }
  func.func @transform_1(%arg0: i32, %arg1: i32, %arg2: i32) -> (i32, i32) {
    %c0_i32 = arith.constant 0 : i32
    return %arg2, %arg1 : i32, i32
  }
  func.func @transform_2(%arg0: i32, %arg1: i32, %arg2: i32) -> (i32, i32) {
    %c0_i32 = arith.constant 0 : i32
    %c0_i32_0 = arith.constant 0 : i32
    return %c0_i32, %arg1 : i32, i32
  }
  func.func @transform_3(%arg0: i32, %arg1: i32, %arg2: i32) -> (i32, i32) {
    %c0_i32 = arith.constant 0 : i32
    return %arg0, %arg1 : i32, i32
  }
}

module attributes {stable_mosaic.version = 11 : i64} {
  func.func @_matmul_kernel(%arg0: i32, %arg1: i32, %arg2: i32, %arg3: memref<16x128xbf16, #tpu.memory_space<vmem>>, %arg4: memref<128x32xbf16, #tpu.memory_space<vmem>>, %arg5: memref<1x32xf32, #tpu.memory_space<vmem>>, %arg6: memref<16x32xbf16, #tpu.memory_space<vmem>>) attributes {dimension_semantics = [#tpu.dimension_semantics<parallel>, #tpu.dimension_semantics<parallel>, #tpu.dimension_semantics<arbitrary>], iteration_bounds = array<i64: 1, 1, 1>, scalar_prefetch = 0 : i64, scratch_operands = 0 : i64, tpu.core_type = #tpu.core_type<tc>, window_params = [{transform_indices = @transform_0, window_bounds = array<i64: 16, 128>}, {transform_indices = @transform_1, window_bounds = array<i64: 128, 32>}, {transform_indices = @transform_2, window_bounds = array<i64: 1, 32>}, {transform_indices = @transform_3, window_bounds = array<i64: 16, 32>}]} {
    %c0 = arith.constant 0 : index
    %c0_0 = arith.constant 0 : index
    %0 = vector.load %arg3[%c0, %c0_0] : memref<16x128xbf16, #tpu.memory_space<vmem>>, vector<16x128xbf16>
    %c0_1 = arith.constant 0 : index
    %c0_2 = arith.constant 0 : index
    %1 = vector.load %arg4[%c0_1, %c0_2] : memref<128x32xbf16, #tpu.memory_space<vmem>>, vector<128x32xbf16>
    %cst = arith.constant dense<0.000000e+00> : vector<16x32xf32>
    %2 = tpu.matmul %0, %1, %cst {dimension_numbers = #tpu.dot_dimension_numbers<[1], [0], [0], [1], [0, 0, 1, 1], [], []>} : vector<16x128xbf16>, vector<128x32xbf16>, vector<16x32xf32> -> vector<16x32xf32>
    %c0_3 = arith.constant 0 : index
    %c0_4 = arith.constant 0 : index
    %3 = vector.load %arg5[%c0_3, %c0_4] : memref<1x32xf32, #tpu.memory_space<vmem>>, vector<1x32xf32>
    %4 = vector.broadcast %3 : vector<1x32xf32> to vector<16x32xf32>
    %5 = arith.addf %2, %4 : vector<16x32xf32>
    %6 = arith.truncf %5 : vector<16x32xf32> to vector<16x32xbf16>
    %c0_5 = arith.constant 0 : index
    %c0_6 = arith.constant 0 : index
    %7 = vector.load %arg6[%c0_5, %c0_6] : memref<16x32xbf16, #tpu.memory_space<vmem>>, vector<16x32xbf16>
    tpu.vector_store %arg6[%c0_5, %c0_6], %6 {strides = array<i32>} : memref<16x32xbf16, #tpu.memory_space<vmem>>, vector<16x32xbf16>,
    return
  }
  func.func @transform_0(%arg0: i32, %arg1: i32, %arg2: i32) -> (i32, i32) {
    %c0_i32 = arith.constant 0 : i32
    return %arg0, %arg2 : i32, i32
  }
  func.func @transform_1(%arg0: i32, %arg1: i32, %arg2: i32) -> (i32, i32) {
    %c0_i32 = arith.constant 0 : i32
    return %arg2, %arg1 : i32, i32
  }
  func.func @transform_2(%arg0: i32, %arg1: i32, %arg2: i32) -> (i32, i32) {
    %c0_i32 = arith.constant 0 : i32
    %c0_i32_0 = arith.constant 0 : i32
    return %c0_i32, %arg1 : i32, i32
  }
  func.func @transform_3(%arg0: i32, %arg1: i32, %arg2: i32) -> (i32, i32) {
    %c0_i32 = arith.constant 0 : i32
    return %arg0, %arg1 : i32, i32
  }
}

module attributes {stable_mosaic.version = 11 : i64} {
  func.func @_matmul_kernel(%arg0: i32, %arg1: i32, %arg2: i32, %arg3: memref<16x32xbf16, #tpu.memory_space<vmem>>, %arg4: memref<32x128xbf16, #tpu.memory_space<vmem>>, %arg5: memref<16x128xf32, #tpu.memory_space<vmem>>) attributes {dimension_semantics = [#tpu.dimension_semantics<parallel>, #tpu.dimension_semantics<parallel>, #tpu.dimension_semantics<arbitrary>], iteration_bounds = array<i64: 1, 1, 1>, scalar_prefetch = 0 : i64, scratch_operands = 0 : i64, tpu.core_type = #tpu.core_type<tc>, window_params = [{transform_indices = @transform_0, window_bounds = array<i64: 16, 32>}, {transform_indices = @transform_1, window_bounds = array<i64: 32, 128>}, {transform_indices = @transform_2, window_bounds = array<i64: 16, 128>}]} {
    %c0 = arith.constant 0 : index
    %c0_0 = arith.constant 0 : index
    %0 = vector.load %arg3[%c0, %c0_0] : memref<16x32xbf16, #tpu.memory_space<vmem>>, vector<16x32xbf16>
    %c0_1 = arith.constant 0 : index
    %c0_2 = arith.constant 0 : index
    %1 = vector.load %arg4[%c0_1, %c0_2] : memref<32x128xbf16, #tpu.memory_space<vmem>>, vector<32x128xbf16>
    %cst = arith.constant dense<0.000000e+00> : vector<16x128xf32>
    %2 = tpu.matmul %0, %1, %cst {dimension_numbers = #tpu.dot_dimension_numbers<[1], [0], [0], [1], [0, 0, 1, 1], [], []>} : vector<16x32xbf16>, vector<32x128xbf16>, vector<16x128xf32> -> vector<16x128xf32>
    %c0_3 = arith.constant 0 : index
    %c0_4 = arith.constant 0 : index
    %3 = vector.load %arg5[%c0_3, %c0_4] : memref<16x128xf32, #tpu.memory_space<vmem>>, vector<16x128xf32>
    tpu.vector_store %arg5[%c0_3, %c0_4], %2 {strides = array<i32>} : memref<16x128xf32, #tpu.memory_space<vmem>>, vector<16x128xf32>,
    return
  }
  func.func @transform_0(%arg0: i32, %arg1: i32, %arg2: i32) -> (i32, i32) {
    %c0_i32 = arith.constant 0 : i32
    return %arg0, %arg2 : i32, i32
  }
  func.func @transform_1(%arg0: i32, %arg1: i32, %arg2: i32) -> (i32, i32) {
    %c0_i32 = arith.constant 0 : i32
    return %arg2, %arg1 : i32, i32
  }
  func.func @transform_2(%arg0: i32, %arg1: i32, %arg2: i32) -> (i32, i32) {
    %c0_i32 = arith.constant 0 : i32
    return %arg0, %arg1 : i32, i32
  }
}

</mosaic_0001>

<llo_original>
// kernel: text_decoder_forward.26
$region0: #{text_decoder_forward.26}
  #allocation0 [shape = 'u32[]', space=smem, size = 0x4, offset = 0x4, fixed_abs, tag = 'smem constant byte address 0x4 - core index']
  #allocation1 [shape = 'u32[144,128]{1,0:T(1,128)}', space=vmem, size = 0x12000, scoped, tag = 'internal scratch']
  %s0 = inlined_call_operand.vmem [shape: bf16[16,32], index: 0, kind: input, shape index: {}]
  %s1 = inlined_call_operand.vmem [shape: f32[1,32], index: 1, kind: input, shape index: {}]
  %s2 = inlined_call_operand.vmem [shape: f32[1,32], index: 2, kind: input, shape index: {}]
  %s3 = inlined_call_operand.vmem [shape: bf16[16,32], index: 3, kind: output, shape index: {}]
  %s4 = sld [smem:[#allocation0]]
  $region22: #{text_decoder_forward.26} parent=0
    _
  %s6 = ssub.s32 1, %s4
  %s7 = scalar_select 0, %s6, %s4
  // Predicated region
  $region2: #{text_decoder_forward.26} parent=0 // pred_check
    _
  $region3: #{text_decoder_forward.26} parent=0 // pred_check_branch
    %9 = sbr.rel (0) target = $region5
  $region4: #{text_decoder_forward.26} parent=0 // pred_region
    _
  $region5: #{text_decoder_forward.26} parent=0 // pred_fallthru
    _
  // Predicated region
  $region6: #{text_decoder_forward.26} parent=0 // pred_check
    _
  $region7: #{text_decoder_forward.26} parent=0 // pred_check_branch
    %11 = sbr.rel (0) target = $region9
  $region8: #{text_decoder_forward.26} parent=0 // pred_region
    _
  $region9: #{text_decoder_forward.26} parent=0 // pred_fallthru
    _
  // Predicated region
  $region10: #{text_decoder_forward.26} parent=0 // pred_check
    _
  $region11: #{text_decoder_forward.26} parent=0 // pred_check_branch
    %13 = sbr.rel (0) target = $region13
  $region12: #{text_decoder_forward.26} parent=0 // pred_region
    _
  $region13: #{text_decoder_forward.26} parent=0 // pred_fallthru
    _
  %v14 = vld [vmem:[%s0] sm:$0xf]
  %v15 = vld [vmem:[%s0 + $0x4] sm:$0xf]
  %v16 = vunpack.c.l.bf16 %v14
  %v17 = vunpack.c.l.bf16 %v15
  %vm18 = vcmask 261120
  %v19 = vsel %vm18, %v16, 0.0
  %20 = vadd.xlane.f32.xlu0 %v19
  %v21 = vpop.xlane.xlu0 %20
  %v22 = vsel %vm18, %v17, 0.0
  %23 = vadd.xlane.f32.xlu0 %v22
  %v24 = vpop.xlane.xlu0 %23
  %v25 = vrcp.pop 32.0
  %v26 = vmul.f32 %v21, %v25
  %v27 = vmul.f32 %v24, %v25
  %v28 = vsub.f32 %v16, %v26
  %v29 = vsub.f32 %v17, %v27
  %v30 = vmul.f32 %v28, %v28
  %v31 = vmul.f32 %v29, %v29
  %v32 = vsel %vm18, %v30, 0.0
  %33 = vadd.xlane.f32.xlu0 %v32
  %v34 = vpop.xlane.xlu0 %33
  %v35 = vsel %vm18, %v31, 0.0
  %36 = vadd.xlane.f32.xlu0 %v35
  %v37 = vpop.xlane.xlu0 %36
  %v38 = vmul.f32 %v34, %v25
  %v39 = vmul.f32 %v37, %v25
  %v40 = vadd.f32 %v38, 1e-05
  %v41 = vadd.f32 %v39, 1e-05
  %v42 = vrsqrt.pop %v40
  %v43 = vrsqrt.pop %v41
  %v44 = vmul.f32 %v28, %v42
  %v45 = vmul.f32 %v29, %v43
  %v46 = vld [vmem:[%s1] sm:$0x1]
  %v48 = vlaneseq
  %v49 = vshrl.u32 %v48, 7
  %v50 = vsub.s32 0, %v49
  %v51 = vrot.slane %v46, %v50
  %v53 = vmul.f32 %v44, %v51
  %v54 = vmul.f32 %v45, %v51
  %v55 = vld [vmem:[%s2] sm:$0x1]
  %v57 = vlaneseq
  %v58 = vshrl.u32 %v57, 7
  %v59 = vsub.s32 0, %v58
  %v60 = vrot.slane %v55, %v59
  %v62 = vadd.f32 %v53, %v60
  %v63 = vadd.f32 %v54, %v60
  %v64 = vpack.c.bf16 %v63, %v62
  %v66 = vunpack.c.l.b16 %v64
  %v67 = vunpack.c.h.b16 %v64
  %v68 = vpack.c.b16 %v66, %v66
  %v69 = vpack.c.b16 %v67, %v67
  %vm72 = vcmask 257024
  %73 = vst.msk [vmem:[%s3] sm:$0xf] %vm72, %v68
  %74 = vst.msk [vmem:[%s3 + $0x4] sm:$0xf] %vm72, %v69
  // Predicated region
  $region14: #{text_decoder_forward.26} parent=0 // pred_check
    _
  $region15: #{text_decoder_forward.26} parent=0 // pred_check_branch
    %76 = sbr.rel (0) target = $region17
  $region16: #{text_decoder_forward.26} parent=0 // pred_region
    _
  $region17: #{text_decoder_forward.26} parent=0 // pred_fallthru
    _
  // Predicated region
  $region18: #{text_decoder_forward.26} parent=0 // pred_check
    _
  $region19: #{text_decoder_forward.26} parent=0 // pred_check_branch
    %78 = sbr.rel (0) target = $region21
  $region20: #{text_decoder_forward.26} parent=0 // pred_region
    _
  $region21: #{text_decoder_forward.26} parent=0 // pred_fallthru
    _

// kernel: text_decoder_forward.27
$region0: #{text_decoder_forward.27}
  #allocation0 [shape = 'u32[]', space=smem, size = 0x4, offset = 0x4, fixed_abs, tag = 'smem constant byte address 0x4 - core index']
  #allocation1 [shape = 'u32[144,128]{1,0:T(1,128)}', space=vmem, size = 0x12000, scoped, tag = 'internal scratch']
  %s0 = inlined_call_operand.vmem [shape: bf16[16,32], index: 0, kind: input, shape index: {}]
  %s1 = inlined_call_operand.vmem [shape: bf16[32,96], index: 1, kind: input, shape index: {}]
  %s2 = inlined_call_operand.vmem [shape: f32[1,96], index: 2, kind: input, shape index: {}]
  %s3 = inlined_call_operand.vmem [shape: bf16[16,96], index: 3, kind: output, shape index: {}]
  %s4 = sld [smem:[#allocation0]]
  $region22: #{text_decoder_forward.27} parent=0
    _
  %s6 = ssub.s32 1, %s4
  %s7 = scalar_select 0, %s6, %s4
  // Predicated region
  $region2: #{text_decoder_forward.27} parent=0 // pred_check
    _
  $region3: #{text_decoder_forward.27} parent=0 // pred_check_branch
    %9 = sbr.rel (0) target = $region5
  $region4: #{text_decoder_forward.27} parent=0 // pred_region
    _
  $region5: #{text_decoder_forward.27} parent=0 // pred_fallthru
    _
  // Predicated region
  $region6: #{text_decoder_forward.27} parent=0 // pred_check
    _
  $region7: #{text_decoder_forward.27} parent=0 // pred_check_branch
    %11 = sbr.rel (0) target = $region9
  $region8: #{text_decoder_forward.27} parent=0 // pred_region
    _
  $region9: #{text_decoder_forward.27} parent=0 // pred_fallthru
    _
  // Predicated region
  $region10: #{text_decoder_forward.27} parent=0 // pred_check
    _
  $region11: #{text_decoder_forward.27} parent=0 // pred_check_branch
    %13 = sbr.rel (0) target = $region13
  $region12: #{text_decoder_forward.27} parent=0 // pred_region
    _
  $region13: #{text_decoder_forward.27} parent=0 // pred_fallthru
    _
  %v15 = vld [vmem:[%s0] sm:$0xf]
  %v16 = vld [vmem:[%s0 + $0x4] sm:$0xf]
  %v17 = vld [vmem:[%s1] sm:$0xf]
  %v18 = vld [vmem:[%s1 + $0x4] sm:$0xf]
  %v19 = vld [vmem:[%s1 + $0x8] sm:$0xf]
  %v20 = vld [vmem:[%s1 + $0xc] sm:$0xf]
  %v21 = vld [vmem:[%s2] sm:$0x1]
  %v23 = vlaneseq
  %v24 = vshrl.u32 %v23, 7
  %v25 = vsub.s32 0, %v24
  %v26 = vrot.slane %v21, %v25
  %v30 = vunpack.c.l.b16 %v15
  %v31 = vunpack.c.l.b16 %v16
  %v32 = vpack.c.b16 %v31, %v30
  %v37 = vunpack.c.l.b16 %v17
  %v38 = vunpack.c.l.b16 %v18
  %v39 = vunpack.c.l.b16 %v19
  %v40 = vunpack.c.l.b16 %v20
  %v41 = vpack.c.b16 %v38, %v37
  %v42 = vpack.c.b16 %v40, %v39
  %vm45 = vcmask 261120
  %v47 = vsel %vm45, %v32, 0
  %49 = vmatprep.subr.bf16.mxu0 0
  %50 = vmatpush1.bf16.msra.mxu0 %v41
  %51 = vmatprep.subr.bf16.mxu0 0
  %52 = vmatpush1.bf16.msra.mxu0 %v42
  %53 = vmatprep.subr.bf16.mxu0 0
  %54 = vmatpush1.bf16.msra.mxu0 0
  %55 = vmatprep.subr.bf16.mxu0 0
  %56 = vmatpush1.bf16.msra.mxu0 0
  %57 = vmatprep.subr.bf16.mxu0 0
  %58 = vmatpush1.bf16.msra.mxu0 0
  %59 = vmatprep.subr.bf16.mxu0 0
  %60 = vmatpush1.bf16.msra.mxu0 0
  %61 = vmatprep.subr.bf16.mxu0 0
  %62 = vmatpush1.bf16.msra.mxu0 0
  %63 = vmatprep.subr.bf16.mxu0 0
  %64 = vmatpush1.bf16.msra.mxu0 0
  %65 = vmatprep.subr.bf16.mxu0 0
  %66 = vmatpush1.bf16.msra.mxu0 0
  %67 = vmatprep.subr.bf16.mxu0 0
  %68 = vmatpush1.bf16.msra.mxu0 0
  %69 = vmatprep.subr.bf16.mxu0 0
  %70 = vmatpush1.bf16.msra.mxu0 0
  %71 = vmatprep.subr.bf16.mxu0 0
  %72 = vmatpush1.bf16.msra.mxu0 0
  %73 = vmatprep.subr.bf16.mxu0 0
  %74 = vmatpush1.bf16.msra.mxu0 0
  %75 = vmatprep.subr.bf16.mxu0 0
  %76 = vmatpush1.bf16.msra.mxu0 0
  %77 = vmatprep.subr.bf16.mxu0 0
  %78 = vmatpush1.bf16.msra.mxu0 0
  %79 = vmatprep.subr.bf16.mxu0 0
  %80 = vmatpush1.bf16.msra.mxu0 0
  %81 = vmatprep.mubr.bf16.mxu0 0
  %82 = vmatmul.mubr.bf16.gmra.mrb[0].mxu0 %v47
  %v83 = vpop.f32.mrb[0].mxu0
  %v84 = vadd.f32 %v26, %v83
  %v85 = vpop.f32.mrb[0].mxu0
  %v86 = vpop.f32.mrb[0].mxu0
  %v87 = vadd.f32 %v26, %v86
  %v88 = vpop.f32.mrb[0].mxu0
  %89 = vdwg.mxu0
  %v90 = vpack.c.bf16 %v87, %v84
  %v92 = vunpack.c.l.b16 %v90
  %v93 = vunpack.c.h.b16 %v90
  %v94 = vpack.c.b16 %v92, %v92
  %v95 = vpack.c.b16 %v93, %v93
  %vm98 = vcmask 781312
  %99 = vst.msk [vmem:[%s3] sm:$0xf] %vm98, %v94
  %100 = vst.msk [vmem:[%s3 + $0x4] sm:$0xf] %vm98, %v95
  // Predicated region
  $region14: #{text_decoder_forward.27} parent=0 // pred_check
    _
  $region15: #{text_decoder_forward.27} parent=0 // pred_check_branch
    %102 = sbr.rel (0) target = $region17
  $region16: #{text_decoder_forward.27} parent=0 // pred_region
    _
  $region17: #{text_decoder_forward.27} parent=0 // pred_fallthru
    _
  // Predicated region
  $region18: #{text_decoder_forward.27} parent=0 // pred_check
    _
  $region19: #{text_decoder_forward.27} parent=0 // pred_check_branch
    %104 = sbr.rel (0) target = $region21
  $region20: #{text_decoder_forward.27} parent=0 // pred_region
    _
  $region21: #{text_decoder_forward.27} parent=0 // pred_fallthru
    _

// kernel: text_decoder_forward.28
$region0: #{text_decoder_forward.28}
  #allocation0 [shape = 'u32[]', space=smem, size = 0x4, offset = 0x4, fixed_abs, tag = 'smem constant byte address 0x4 - core index']
  #allocation1 [shape = 'u32[144,128]{1,0:T(1,128)}', space=vmem, size = 0x12000, scoped, tag = 'internal scratch']
  #allocation2 [shape = 'f32[8,1]{1,0:T(8,128)}', space=vmem, size = 0x1000, scoped, tag = 'scratch operand']
  #allocation3 [shape = 'f32[8,1]{1,0:T(8,128)}', space=vmem, size = 0x1000, scoped, tag = 'scratch operand']
  #allocation4 [shape = 'f32[8,8]{1,0:T(8,128)}', space=vmem, size = 0x1000, scoped, tag = 'scratch operand']
  %s0 = inlined_call_operand.vmem [shape: bf16[8,8,8], index: 0, kind: input, shape index: {}]
  %s1 = inlined_call_operand.vmem [shape: bf16[8,8,8], index: 1, kind: input, shape index: {}]
  %s2 = inlined_call_operand.vmem [shape: bf16[8,8,8], index: 2, kind: input, shape index: {}]
  %s3 = inlined_call_operand.vmem [shape: bf16[8,8,8], index: 3, kind: output, shape index: {}]
  %s4 = sld [smem:[#allocation0]]
  $region53: #{text_decoder_forward.28} parent=0
    _
  %s6 = ssub.s32 1, %s4
  %s7 = scalar_select 0, %s6, %s4
  loop: start=0, step=1, limit=10
  $region2: #{text_decoder_forward.28} parent=0 // loop_pre_header
    _
  $region3: #{text_decoder_forward.28} parent=0 // loop_header
    %s9 = sphi 0, %s13
    %p10 = scmp.ge.s32.totalorder %s9, 10
    %s16 = sphi 0, %s28
    %s17 = sphi 0, %s24
    %s18 = sphi 0, %s16
    %s19 = sphi 0, %s17
    %s20 = sphi 0, %s18
    %s21 = sphi 0, %s19
    %s31 = sphi 0, %s33
    %s34 = sphi 0, %s31
    %s35 = sphi 0, %s34
    %s51 = sphi 0, %s35
    %s59 = sphi 0, %s61
    %s62 = sphi 0, %s59
    %s63 = sphi 0, %s62
    %s79 = sphi 0, %s63
    %s87 = sphi 0, %s89
    %s90 = sphi 0, %s87
    %s91 = sphi 0, %s90
    %s107 = sphi 0, %s91
    %s113 = sphi 0, %s115
    %s116 = sphi 0, %s113
    %s117 = sphi 0, %s116
    %s133 = sphi 0, %s117
  $region4: #{text_decoder_forward.28} parent=0 // loop_header_branch
    %12 = sbr.rel (%p10) target = $region8
  $region5: #{text_decoder_forward.28} parent=0 // loop_body
    %s14 = ssub.s32 %s9, 1
    %s15 = ssub.s32 %s9, 2
    %s22 = sadd.s32 1, %s17
    %p23 = scmp.ge.s32.totalorder %s22, 1
    %s24 = scalar_select %p23, 0, %s22
    %s25 = sadd.s32 1, %s16
    %s26 = scalar_select %p23, %s25, %s16
    %p27 = scmp.ge.s32.totalorder %s26, 8
    %s28 = scalar_select %p27, 0, %s26
    %s29 = ssub.s32 %s16, %s28
    %p30 = scmp.eq.s32.totalorder %s29, 0
    %s32 = sadd.s32 %s31, 1
    %s33 = scalar_select %p30, %s31, %s32
    %p36 = pneg %p30
    %p37 = scmp.eq.s32.totalorder %s9, 7
    %p38 = por %p36, %p37
    %p39 = scmp.ne.s32.totalorder %s31, %s34
    %p40 = scmp.eq.s32.totalorder %s9, 0
    %p41 = por %p39, %p40
    %p42 = scmp.ne.s32.totalorder %s31, %s34
    %p43 = scmp.eq.s32.totalorder %s14, 7
    %p44 = por %p42, %p43
    %p45 = scmp.ne.s32.totalorder %s34, %s35
    %p46 = scmp.eq.s32.totalorder %s14, 0
    %p47 = por %p45, %p46
    %p48 = scmp.ne.s32.totalorder %s34, %s35
    %p49 = scmp.eq.s32.totalorder %s15, 7
    %p50 = por %p48, %p49
    %p52 = scmp.ne.s32.totalorder %s35, %s51
    %p53 = scmp.eq.s32.totalorder %s15, 0
    %p54 = por %p52, %p53
    %s55 = ssub.s32 %s16, %s28
    %s56 = ssub.s32 %s17, %s24
    %s57 = sor.u32 %s55, %s56
    %p58 = scmp.eq.s32.totalorder %s57, 0
    %s60 = sadd.s32 %s59, 1
    %s61 = scalar_select %p58, %s59, %s60
    %p64 = pneg %p58
    %p65 = scmp.eq.s32.totalorder %s9, 7
    %p66 = por %p64, %p65
    %p67 = scmp.ne.s32.totalorder %s59, %s62
    %p68 = scmp.eq.s32.totalorder %s9, 0
    %p69 = por %p67, %p68
    %p70 = scmp.ne.s32.totalorder %s59, %s62
    %p71 = scmp.eq.s32.totalorder %s14, 7
    %p72 = por %p70, %p71
    %p73 = scmp.ne.s32.totalorder %s62, %s63
    %p74 = scmp.eq.s32.totalorder %s14, 0
    %p75 = por %p73, %p74
    %p76 = scmp.ne.s32.totalorder %s62, %s63
    %p77 = scmp.eq.s32.totalorder %s15, 7
    %p78 = por %p76, %p77
    %p80 = scmp.ne.s32.totalorder %s63, %s79
    %p81 = scmp.eq.s32.totalorder %s15, 0
    %p82 = por %p80, %p81
    %s83 = ssub.s32 %s16, %s28
    %s84 = ssub.s32 %s17, %s24
    %s85 = sor.u32 %s83, %s84
    %p86 = scmp.eq.s32.totalorder %s85, 0
    %s88 = sadd.s32 %s87, 1
    %s89 = scalar_select %p86, %s87, %s88
    %p92 = pneg %p86
    %p93 = scmp.eq.s32.totalorder %s9, 7
    %p94 = por %p92, %p93
    %p95 = scmp.ne.s32.totalorder %s87, %s90
    %p96 = scmp.eq.s32.totalorder %s9, 0
    %p97 = por %p95, %p96
    %p98 = scmp.ne.s32.totalorder %s87, %s90
    %p99 = scmp.eq.s32.totalorder %s14, 7
    %p100 = por %p98, %p99
    %p101 = scmp.ne.s32.totalorder %s90, %s91
    %p102 = scmp.eq.s32.totalorder %s14, 0
    %p103 = por %p101, %p102
    %p104 = scmp.ne.s32.totalorder %s90, %s91
    %p105 = scmp.eq.s32.totalorder %s15, 7
    %p106 = por %p104, %p105
    %p108 = scmp.ne.s32.totalorder %s91, %s107
    %p109 = scmp.eq.s32.totalorder %s15, 0
    %p110 = por %p108, %p109
    %s111 = ssub.s32 %s16, %s28
    %p112 = scmp.eq.s32.totalorder %s111, 0
    %s114 = sadd.s32 %s113, 1
    %s115 = scalar_select %p112, %s113, %s114
    %p118 = pneg %p112
    %p119 = scmp.eq.s32.totalorder %s9, 7
    %p120 = por %p118, %p119
    %p121 = scmp.ne.s32.totalorder %s113, %s116
    %p122 = scmp.eq.s32.totalorder %s9, 0
    %p123 = por %p121, %p122
    %p124 = scmp.ne.s32.totalorder %s113, %s116
    %p125 = scmp.eq.s32.totalorder %s14, 7
    %p126 = por %p124, %p125
    %p127 = scmp.ne.s32.totalorder %s116, %s117
    %p128 = scmp.eq.s32.totalorder %s14, 0
    %p129 = por %p127, %p128
    %p130 = scmp.ne.s32.totalorder %s116, %s117
    %p131 = scmp.eq.s32.totalorder %s15, 7
    %p132 = por %p130, %p131
    %p134 = scmp.ne.s32.totalorder %s117, %s133
    %p135 = scmp.eq.s32.totalorder %s15, 0
    %p136 = por %p134, %p135
    %p137 = scmp.le.s32.totalorder 1, %s9
    %p138 = scmp.lt.s32.totalorder %s9, 9
    %p139 = pnand %p137, %p138
    %p140 = pneg %p139
    // Predicated region
    $region9: #{text_decoder_forward.28} parent=5 // pred_check
      _
    $region10: #{text_decoder_forward.28} parent=5 // pred_check_branch
      %142 = sbr.rel (%p139) target = $region12
    $region11: #{text_decoder_forward.28} parent=5 // pred_region
      %s143 = ssub.s32 %s9, 1
    $region12: #{text_decoder_forward.28} parent=5 // pred_fallthru
      _
    %p144 = scmp.lt.s32.totalorder %s9, 8
    // Predicated region
    $region13: #{text_decoder_forward.28} parent=5 // pred_check
      %p145 = pneg %p144
    $region14: #{text_decoder_forward.28} parent=5 // pred_check_branch
      %147 = sbr.rel (%p145) target = $region16
    $region15: #{text_decoder_forward.28} parent=5 // pred_region
      // Predicated region
      $region17: #{text_decoder_forward.28} parent=15 // pred_check
        %p148 = pneg %p41
      $region18: #{text_decoder_forward.28} parent=15 // pred_check_branch
        %150 = sbr.rel (%p148) target = $region20
      $region19: #{text_decoder_forward.28} parent=15 // pred_region
        %p151 = scmp.lt.s32.totalorder %s16, 7
        %s152 = scalar_select %p151, %s16, 7
        %s153 = smul.addr %s152, 4
        %s154 = scalar_lea.vmem %s0, %s153
      $region20: #{text_decoder_forward.28} parent=15 // pred_fallthru
        _
      // Predicated region
      $region21: #{text_decoder_forward.28} parent=15 // pred_check
        %p155 = pneg %p69
      $region22: #{text_decoder_forward.28} parent=15 // pred_check_branch
        %157 = sbr.rel (%p155) target = $region24
      $region23: #{text_decoder_forward.28} parent=15 // pred_region
        %p158 = scmp.lt.s32.totalorder %s16, 7
        %s159 = scalar_select %p158, %s16, 7
        %p160 = scmp.lt.s32.totalorder %s17, 0
        %s161 = scalar_select %p160, %s17, 0
        %s162 = sadd.s32 %s161, %s159
        %s163 = smul.addr %s162, 4
        %s164 = scalar_lea.vmem %s1, %s163
      $region24: #{text_decoder_forward.28} parent=15 // pred_fallthru
        _
      // Predicated region
      $region25: #{text_decoder_forward.28} parent=15 // pred_check
        %p165 = pneg %p97
      $region26: #{text_decoder_forward.28} parent=15 // pred_check_branch
        %167 = sbr.rel (%p165) target = $region28
      $region27: #{text_decoder_forward.28} parent=15 // pred_region
        %p168 = scmp.lt.s32.totalorder %s16, 7
        %s169 = scalar_select %p168, %s16, 7
        %p170 = scmp.lt.s32.totalorder %s17, 0
        %s171 = scalar_select %p170, %s17, 0
        %s172 = sadd.s32 %s171, %s169
        %s173 = smul.addr %s172, 4
        %s174 = scalar_lea.vmem %s2, %s173
      $region28: #{text_decoder_forward.28} parent=15 // pred_fallthru
        _
    $region16: #{text_decoder_forward.28} parent=5 // pred_fallthru
      _
    %p175 = scmp.le.s32.totalorder 1, %s9
    %p176 = scmp.lt.s32.totalorder %s9, 9
    %p177 = pnand %p175, %p176
    %p178 = pneg %p177
    // Predicated region
    $region29: #{text_decoder_forward.28} parent=5 // pred_check
      _
    $region30: #{text_decoder_forward.28} parent=5 // pred_check_branch
      %180 = sbr.rel (%p177) target = $region32
    $region31: #{text_decoder_forward.28} parent=5 // pred_region
      %s181 = ssub.s32 %s9, 1
      %p182 = scmp.lt.s32.totalorder %s18, 7
      %s183 = scalar_select %p182, %s18, 7
      %s184 = smul.addr %s183, 4
      %s185 = scalar_lea.vmem %s0, %s184
      %p186 = pneg %p47
      %p187 = pneg %p44
      %p188 = scmp.lt.s32.totalorder %s18, 7
      %s189 = scalar_select %p188, %s18, 7
      %p190 = scmp.lt.s32.totalorder %s19, 0
      %s191 = scalar_select %p190, %s19, 0
      %s192 = sadd.s32 %s191, %s189
      %s193 = smul.addr %s192, 4
      %s194 = scalar_lea.vmem %s1, %s193
      %p195 = pneg %p75
      %p196 = pneg %p72
      %p197 = scmp.lt.s32.totalorder %s18, 7
      %s198 = scalar_select %p197, %s18, 7
      %p199 = scmp.lt.s32.totalorder %s19, 0
      %s200 = scalar_select %p199, %s19, 0
      %s201 = sadd.s32 %s200, %s198
      %s202 = smul.addr %s201, 4
      %s203 = scalar_lea.vmem %s2, %s202
      %p204 = pneg %p103
      %p205 = pneg %p100
      %p206 = pneg %p129
      %p207 = pneg %p126
      %p208 = scmp.lt.s32.totalorder %s18, 7
      %s209 = scalar_select %p208, %s18, 7
      %s210 = smul.addr %s209, 4
      %s211 = scalar_lea.vmem %s3, %s210
      %p212 = scmp.lt.s32.totalorder %s18, 7
      %s213 = scalar_select %p212, %s18, 7
      %s214 = smul.addr %s213, 4
      %s215 = scalar_lea.vmem %s0, %s214
      %p216 = scmp.lt.s32.totalorder %s18, 7
      %s217 = scalar_select %p216, %s18, 7
      %p218 = scmp.lt.s32.totalorder %s19, 0
      %s219 = scalar_select %p218, %s19, 0
      %s220 = sadd.s32 %s219, %s217
      %s221 = smul.addr %s220, 4
      %s222 = scalar_lea.vmem %s1, %s221
      %p223 = scmp.lt.s32.totalorder %s18, 7
      %s224 = scalar_select %p223, %s18, 7
      %p225 = scmp.lt.s32.totalorder %s19, 0
      %s226 = scalar_select %p225, %s19, 0
      %s227 = sadd.s32 %s226, %s224
      %s228 = smul.addr %s227, 4
      %s229 = scalar_lea.vmem %s2, %s228
      %p230 = scmp.lt.s32.totalorder %s18, 7
      %s231 = scalar_select %p230, %s18, 7
      %s232 = smul.addr %s231, 4
      %s233 = scalar_lea.vmem %s3, %s232
      %p235 = scmp.eq.s32.totalorder %s19, 0
      // Predicated region
      $region33: #{text_decoder_forward.28} parent=31 // pred_check
        %p236 = pneg %p235
      $region34: #{text_decoder_forward.28} parent=31 // pred_check_branch
        %238 = sbr.rel (%p236) target = $region36
      $region35: #{text_decoder_forward.28} parent=31 // pred_region
        %vm239 = vcmask 7168
        %240 = vst.msk [vmem:[#allocation2] sm:$0xff] %vm239, -1e+30
        %241 = vst.msk [vmem:[#allocation3] sm:$0xff] %vm239, 0.0
        %vm242 = vcmask 64512
        %243 = vst.msk [vmem:[#allocation4] sm:$0xff] %vm242, 0.0
      $region36: #{text_decoder_forward.28} parent=31 // pred_fallthru
        _
      %v244 = vld [vmem:[%s215] sm:$0xf]
      %v245 = vld [vmem:[%s222] sm:$0xf]
      %v246 = vld [vmem:[%s229] sm:$0xf]
      %vm247 = vcmask 64512
      %v249 = vsel %vm247, %v244, 0
      %v252 = vsel %vm247, %v245, 0
      %254 = vmatprep.subr.bf16.mxu0 0
      %255 = vmatpush1.bf16.xpose.msra.mxu0 %v252
      %256 = vmatprep.subr.bf16.mxu0 0
      %257 = vmatpush1.bf16.xpose.msra.mxu0 0
      %258 = vmatprep.subr.bf16.mxu0 0
      %259 = vmatpush1.bf16.xpose.msra.mxu0 0
      %260 = vmatprep.subr.bf16.mxu0 0
      %261 = vmatpush1.bf16.xpose.msra.mxu0 0
      %262 = vmatprep.subr.bf16.mxu0 0
      %263 = vmatpush1.bf16.xpose.msra.mxu0 0
      %264 = vmatprep.subr.bf16.mxu0 0
      %265 = vmatpush1.bf16.xpose.msra.mxu0 0
      %266 = vmatprep.subr.bf16.mxu0 0
      %267 = vmatpush1.bf16.xpose.msra.mxu0 0
      %268 = vmatprep.subr.bf16.mxu0 0
      %269 = vmatpush1.bf16.xpose.msra.mxu0 0
      %270 = vmatprep.subr.bf16.mxu0 0
      %271 = vmatpush1.bf16.xpose.msra.mxu0 0
      %272 = vmatprep.subr.bf16.mxu0 0
      %273 = vmatpush1.bf16.xpose.msra.mxu0 0
      %274 = vmatprep.subr.bf16.mxu0 0
      %275 = vmatpush1.bf16.xpose.msra.mxu0 0
      %276 = vmatprep.subr.bf16.mxu0 0
      %277 = vmatpush1.bf16.xpose.msra.mxu0 0
      %278 = vmatprep.subr.bf16.mxu0 0
      %279 = vmatpush1.bf16.xpose.msra.mxu0 0
      %280 = vmatprep.subr.bf16.mxu0 0
      %281 = vmatpush1.bf16.xpose.msra.mxu0 0
      %282 = vmatprep.subr.bf16.mxu0 0
      %283 = vmatpush1.bf16.xpose.msra.mxu0 0
      %284 = vmatprep.subr.bf16.mxu0 0
      %285 = vmatpush1.bf16.xpose.msra.mxu0 0
      %286 = vmatprep.mubr.bf16.mxu0 0
      %287 = vmatmul.mubr.bf16.gmra.mrb[0].mxu0 %v249
      %v288 = vpop.f32.mrb[0].mxu0
      %v289 = vadd.f32 0.0, %v288
      %v290 = vpop.f32.mrb[0].mxu0
      %v291 = vpop.f32.mrb[0].mxu0
      %v292 = vpop.f32.mrb[0].mxu0
      %293 = vdwg.mxu0
      %v294 = vmul.f32 %v289, 0.35355338
      %s295 = smul.u32 %s19, 8
      %v296 = vlaneseq
      %v297 = vand.u32 %v296, 127
      %v298 = vstv %s295
      %v299 = vadd.s32 %v298, %v297
      %v300 = vlaneseq
      %v301 = vshrl.u32 %v300, 7
      %vm302 = vcmp.gt.s32.totalorder %v299, %v301
      %v303 = vsel %vm302, -inf, %v294
      %v304 = vld [vmem:[#allocation2] sm:$0xff]
      %v305 = vsel %vm247, %v303, -inf
      %306 = vmax.xlane.f32.xlu0 %v305
      %v307 = vpop.xlane.xlu0 %306
      %v308 = vmax.f32 %v304, %v307
      %v309 = vsub.f32 %v304, %v308
      %v310 = vmul.f32 %v309, 1.442695
      %v311 = vpow.pop %v310
      %313 = vset.pattern.permute.xlu0 0
      %314 = vperm.xlu0 %313, %v308
      %v315 = vpop.permute.xlu0 %314
      %v317 = vsub.f32 %v303, %v315
      %v318 = vmul.f32 %v317, 1.442695
      %v319 = vpow.pop %v318
      %v320 = vld [vmem:[#allocation3] sm:$0xff]
      %v321 = vmul.f32 %v311, %v320
      %v322 = vsel %vm247, %v319, 0.0
      %323 = vadd.xlane.f32.xlu0 %v322
      %v324 = vpop.xlane.xlu0 %323
      %v325 = vadd.f32 %v321, %v324
      %vm326 = vcmask 7168
      %327 = vst.msk [vmem:[#allocation3] sm:$0xff] %vm326, %v325
      %v328 = vld [vmem:[#allocation4] sm:$0xff]
      %330 = vset.pattern.permute.xlu0 0
      %331 = vperm.xlu0 %330, %v311
      %v332 = vpop.permute.xlu0 %331
      %v334 = vmul.f32 %v332, %v328
      %v335 = vpack.c.bf16 %v319, %v319
      %v337 = vsel %vm247, %v335, 0
      %vm339 = vcmask 1043456
      %v341 = vsel %vm339, %v246, 0
      %343 = vmatprep.subr.bf16.mxu0 0
      %344 = vmatpush1.bf16.msra.mxu0 %v341
      %345 = vmatprep.subr.bf16.mxu0 0
      %346 = vmatpush1.bf16.msra.mxu0 0
      %347 = vmatprep.subr.bf16.mxu0 0
      %348 = vmatpush1.bf16.msra.mxu0 0
      %349 = vmatprep.subr.bf16.mxu0 0
      %350 = vmatpush1.bf16.msra.mxu0 0
      %351 = vmatprep.subr.bf16.mxu0 0
      %352 = vmatpush1.bf16.msra.mxu0 0
      %353 = vmatprep.subr.bf16.mxu0 0
      %354 = vmatpush1.bf16.msra.mxu0 0
      %355 = vmatprep.subr.bf16.mxu0 0
      %356 = vmatpush1.bf16.msra.mxu0 0
      %357 = vmatprep.subr.bf16.mxu0 0
      %358 = vmatpush1.bf16.msra.mxu0 0
      %359 = vmatprep.subr.bf16.mxu0 0
      %360 = vmatpush1.bf16.msra.mxu0 0
      %361 = vmatprep.subr.bf16.mxu0 0
      %362 = vmatpush1.bf16.msra.mxu0 0
      %363 = vmatprep.subr.bf16.mxu0 0
      %364 = vmatpush1.bf16.msra.mxu0 0
      %365 = vmatprep.subr.bf16.mxu0 0
      %366 = vmatpush1.bf16.msra.mxu0 0
      %367 = vmatprep.subr.bf16.mxu0 0
      %368 = vmatpush1.bf16.msra.mxu0 0
      %369 = vmatprep.subr.bf16.mxu0 0
      %370 = vmatpush1.bf16.msra.mxu0 0
      %371 = vmatprep.subr.bf16.mxu0 0
      %372 = vmatpush1.bf16.msra.mxu0 0
      %373 = vmatprep.subr.bf16.mxu0 0
      %374 = vmatpush1.bf16.msra.mxu0 0
      %375 = vmatprep.mubr.bf16.mxu0 0
      %376 = vmatmul.mubr.bf16.gmra.mrb[0].mxu0 %v337
      %v377 = vpop.f32.mrb[0].mxu0
      %v378 = vadd.f32 0.0, %v377
      %v379 = vpop.f32.mrb[0].mxu0
      %v380 = vpop.f32.mrb[0].mxu0
      %v381 = vpop.f32.mrb[0].mxu0
      %382 = vdwg.mxu0
      %v383 = vadd.f32 %v334, %v378
      %384 = vst.msk [vmem:[#allocation4] sm:$0xff] %vm247, %v383
      %385 = vst.msk [vmem:[#allocation2] sm:$0xff] %vm326, %v308
      // Predicated region
      $region37: #{text_decoder_forward.28} parent=31 // pred_check
        %p386 = pneg %p235
      $region38: #{text_decoder_forward.28} parent=31 // pred_check_branch
        %388 = sbr.rel (%p386) target = $region40
      $region39: #{text_decoder_forward.28} parent=31 // pred_region
        %v389 = vld [vmem:[#allocation4] sm:$0xff]
        %v390 = vld [vmem:[#allocation3] sm:$0xff]
        %v391 = vrcp.pop %v390
        %393 = vset.pattern.permute.xlu0 0
        %394 = vperm.xlu0 %393, %v391
        %v395 = vpop.permute.xlu0 %394
        %v397 = vmul.f32 %v389, %v395
        %v398 = vpack.c.bf16 %v397, %v397
        %vm399 = vcmask 60416
        %400 = vst.msk [vmem:[%s233] sm:$0xf] %vm399, %v398
      $region40: #{text_decoder_forward.28} parent=31 // pred_fallthru
        _
      %p401 = scmp.lt.s32.totalorder %s18, 7
      %s402 = scalar_select %p401, %s18, 7
      %s403 = smul.addr %s402, 4
      %s404 = scalar_lea.vmem %s3, %s403
      // Predicated region
      $region41: #{text_decoder_forward.28} parent=31 // pred_check
        %p405 = pneg %p126
      $region42: #{text_decoder_forward.28} parent=31 // pred_check_branch
        %407 = sbr.rel (%p405) target = $region44
      $region43: #{text_decoder_forward.28} parent=31 // pred_region
        _
      $region44: #{text_decoder_forward.28} parent=31 // pred_fallthru
        _
    $region32: #{text_decoder_forward.28} parent=5 // pred_fallthru
      _
    %p408 = scmp.le.s32.totalorder 2, %s9
    // Predicated region
    $region45: #{text_decoder_forward.28} parent=5 // pred_check
      %p409 = pneg %p408
    $region46: #{text_decoder_forward.28} parent=5 // pred_check_branch
      %411 = sbr.rel (%p409) target = $region48
    $region47: #{text_decoder_forward.28} parent=5 // pred_region
      %s412 = ssub.s32 %s9, 2
      // Predicated region
      $region49: #{text_decoder_forward.28} parent=47 // pred_check
        %p413 = pneg %p132
      $region50: #{text_decoder_forward.28} parent=47 // pred_check_branch
        %415 = sbr.rel (%p413) target = $region52
      $region51: #{text_decoder_forward.28} parent=47 // pred_region
        %p416 = scmp.lt.s32.totalorder %s20, 7
        %s417 = scalar_select %p416, %s20, 7
        %s418 = smul.addr %s417, 4
        %s419 = scalar_lea.vmem %s3, %s418
      $region52: #{text_decoder_forward.28} parent=47 // pred_fallthru
        _
    $region48: #{text_decoder_forward.28} parent=5 // pred_fallthru
      _
  $region6: #{text_decoder_forward.28} parent=0 // loop_footer
    %s13 = sadd.s32 1, %s9
  $region7: #{text_decoder_forward.28} parent=0 // loop_footer_branch
    %8 = sbr.rel target = $region3
  $region8: #{text_decoder_forward.28} parent=0 // loop_exit
    _

// kernel: text_decoder_forward.29
$region0: #{text_decoder_forward.29}
  #allocation0 [shape = 'u32[]', space=smem, size = 0x4, offset = 0x4, fixed_abs, tag = 'smem constant byte address 0x4 - core index']
  #allocation1 [shape = 'u32[144,128]{1,0:T(1,128)}', space=vmem, size = 0x12000, scoped, tag = 'internal scratch']
  %s0 = inlined_call_operand.vmem [shape: bf16[16,32], index: 0, kind: input, shape index: {}]
  %s1 = inlined_call_operand.vmem [shape: bf16[32,32], index: 1, kind: input, shape index: {}]
  %s2 = inlined_call_operand.vmem [shape: f32[1,32], index: 2, kind: input, shape index: {}]
  %s3 = inlined_call_operand.vmem [shape: bf16[16,32], index: 3, kind: output, shape index: {}]
  %s4 = sld [smem:[#allocation0]]
  $region22: #{text_decoder_forward.29} parent=0
    _
  %s6 = ssub.s32 1, %s4
  %s7 = scalar_select 0, %s6, %s4
  // Predicated region
  $region2: #{text_decoder_forward.29} parent=0 // pred_check
    _
  $region3: #{text_decoder_forward.29} parent=0 // pred_check_branch
    %9 = sbr.rel (0) target = $region5
  $region4: #{text_decoder_forward.29} parent=0 // pred_region
    _
  $region5: #{text_decoder_forward.29} parent=0 // pred_fallthru
    _
  // Predicated region
  $region6: #{text_decoder_forward.29} parent=0 // pred_check
    _
  $region7: #{text_decoder_forward.29} parent=0 // pred_check_branch
    %11 = sbr.rel (0) target = $region9
  $region8: #{text_decoder_forward.29} parent=0 // pred_region
    _
  $region9: #{text_decoder_forward.29} parent=0 // pred_fallthru
    _
  // Predicated region
  $region10: #{text_decoder_forward.29} parent=0 // pred_check
    _
  $region11: #{text_decoder_forward.29} parent=0 // pred_check_branch
    %13 = sbr.rel (0) target = $region13
  $region12: #{text_decoder_forward.29} parent=0 // pred_region
    _
  $region13: #{text_decoder_forward.29} parent=0 // pred_fallthru
    _
  %v15 = vld [vmem:[%s0] sm:$0xf]
  %v16 = vld [vmem:[%s0 + $0x4] sm:$0xf]
  %v17 = vld [vmem:[%s1] sm:$0xf]
  %v18 = vld [vmem:[%s1 + $0x4] sm:$0xf]
  %v19 = vld [vmem:[%s1 + $0x8] sm:$0xf]
  %v20 = vld [vmem:[%s1 + $0xc] sm:$0xf]
  %v21 = vld [vmem:[%s2] sm:$0x1]
  %v23 = vlaneseq
  %v24 = vshrl.u32 %v23, 7
  %v25 = vsub.s32 0, %v24
  %v26 = vrot.slane %v21, %v25
  %v30 = vunpack.c.l.b16 %v15
  %v31 = vunpack.c.l.b16 %v16
  %v32 = vpack.c.b16 %v31, %v30
  %v37 = vunpack.c.l.b16 %v17
  %v38 = vunpack.c.l.b16 %v18
  %v39 = vunpack.c.l.b16 %v19
  %v40 = vunpack.c.l.b16 %v20
  %v41 = vpack.c.b16 %v38, %v37
  %v42 = vpack.c.b16 %v40, %v39
  %vm45 = vcmask 261120
  %v47 = vsel %vm45, %v32, 0
  %49 = vmatprep.subr.bf16.mxu0 0
  %50 = vmatpush1.bf16.msra.mxu0 %v41
  %51 = vmatprep.subr.bf16.mxu0 0
  %52 = vmatpush1.bf16.msra.mxu0 %v42
  %53 = vmatprep.subr.bf16.mxu0 0
  %54 = vmatpush1.bf16.msra.mxu0 0
  %55 = vmatprep.subr.bf16.mxu0 0
  %56 = vmatpush1.bf16.msra.mxu0 0
  %57 = vmatprep.subr.bf16.mxu0 0
  %58 = vmatpush1.bf16.msra.mxu0 0
  %59 = vmatprep.subr.bf16.mxu0 0
  %60 = vmatpush1.bf16.msra.mxu0 0
  %61 = vmatprep.subr.bf16.mxu0 0
  %62 = vmatpush1.bf16.msra.mxu0 0
  %63 = vmatprep.subr.bf16.mxu0 0
  %64 = vmatpush1.bf16.msra.mxu0 0
  %65 = vmatprep.subr.bf16.mxu0 0
  %66 = vmatpush1.bf16.msra.mxu0 0
  %67 = vmatprep.subr.bf16.mxu0 0
  %68 = vmatpush1.bf16.msra.mxu0 0
  %69 = vmatprep.subr.bf16.mxu0 0
  %70 = vmatpush1.bf16.msra.mxu0 0
  %71 = vmatprep.subr.bf16.mxu0 0
  %72 = vmatpush1.bf16.msra.mxu0 0
  %73 = vmatprep.subr.bf16.mxu0 0
  %74 = vmatpush1.bf16.msra.mxu0 0
  %75 = vmatprep.subr.bf16.mxu0 0
  %76 = vmatpush1.bf16.msra.mxu0 0
  %77 = vmatprep.subr.bf16.mxu0 0
  %78 = vmatpush1.bf16.msra.mxu0 0
  %79 = vmatprep.subr.bf16.mxu0 0
  %80 = vmatpush1.bf16.msra.mxu0 0
  %81 = vmatprep.mubr.bf16.mxu0 0
  %82 = vmatmul.mubr.bf16.gmra.mrb[0].mxu0 %v47
  %v83 = vpop.f32.mrb[0].mxu0
  %v84 = vadd.f32 %v26, %v83
  %v85 = vpop.f32.mrb[0].mxu0
  %v86 = vpop.f32.mrb[0].mxu0
  %v87 = vadd.f32 %v26, %v86
  %v88 = vpop.f32.mrb[0].mxu0
  %89 = vdwg.mxu0
  %v90 = vpack.c.bf16 %v87, %v84
  %v92 = vunpack.c.l.b16 %v90
  %v93 = vunpack.c.h.b16 %v90
  %v94 = vpack.c.b16 %v92, %v92
  %v95 = vpack.c.b16 %v93, %v93
  %vm98 = vcmask 257024
  %99 = vst.msk [vmem:[%s3] sm:$0xf] %vm98, %v94
  %100 = vst.msk [vmem:[%s3 + $0x4] sm:$0xf] %vm98, %v95
  // Predicated region
  $region14: #{text_decoder_forward.29} parent=0 // pred_check
    _
  $region15: #{text_decoder_forward.29} parent=0 // pred_check_branch
    %102 = sbr.rel (0) target = $region17
  $region16: #{text_decoder_forward.29} parent=0 // pred_region
    _
  $region17: #{text_decoder_forward.29} parent=0 // pred_fallthru
    _
  // Predicated region
  $region18: #{text_decoder_forward.29} parent=0 // pred_check
    _
  $region19: #{text_decoder_forward.29} parent=0 // pred_check_branch
    %104 = sbr.rel (0) target = $region21
  $region20: #{text_decoder_forward.29} parent=0 // pred_region
    _
  $region21: #{text_decoder_forward.29} parent=0 // pred_fallthru
    _

// kernel: text_decoder_forward.32
$region0: #{text_decoder_forward.32}
  #allocation0 [shape = 'u32[]', space=smem, size = 0x4, offset = 0x4, fixed_abs, tag = 'smem constant byte address 0x4 - core index']
  #allocation1 [shape = 'u32[144,128]{1,0:T(1,128)}', space=vmem, size = 0x12000, scoped, tag = 'internal scratch']
  %s0 = inlined_call_operand.vmem [shape: bf16[32,32], index: 0, kind: input, shape index: {}]
  %s1 = inlined_call_operand.vmem [shape: bf16[32,64], index: 1, kind: input, shape index: {}]
  %s2 = inlined_call_operand.vmem [shape: f32[1,64], index: 2, kind: input, shape index: {}]
  %s3 = inlined_call_operand.vmem [shape: bf16[32,64], index: 3, kind: output, shape index: {}]
  %s4 = sld [smem:[#allocation0]]
  $region22: #{text_decoder_forward.32} parent=0
    _
  %s6 = ssub.s32 1, %s4
  %s7 = scalar_select 0, %s6, %s4
  // Predicated region
  $region2: #{text_decoder_forward.32} parent=0 // pred_check
    _
  $region3: #{text_decoder_forward.32} parent=0 // pred_check_branch
    %9 = sbr.rel (0) target = $region5
  $region4: #{text_decoder_forward.32} parent=0 // pred_region
    _
  $region5: #{text_decoder_forward.32} parent=0 // pred_fallthru
    _
  // Predicated region
  $region6: #{text_decoder_forward.32} parent=0 // pred_check
    _
  $region7: #{text_decoder_forward.32} parent=0 // pred_check_branch
    %11 = sbr.rel (0) target = $region9
  $region8: #{text_decoder_forward.32} parent=0 // pred_region
    _
  $region9: #{text_decoder_forward.32} parent=0 // pred_fallthru
    _
  // Predicated region
  $region10: #{text_decoder_forward.32} parent=0 // pred_check
    _
  $region11: #{text_decoder_forward.32} parent=0 // pred_check_branch
    %13 = sbr.rel (0) target = $region13
  $region12: #{text_decoder_forward.32} parent=0 // pred_region
    _
  $region13: #{text_decoder_forward.32} parent=0 // pred_fallthru
    _
  %v15 = vld [vmem:[%s0] sm:$0xf]
  %v16 = vld [vmem:[%s0 + $0x4] sm:$0xf]
  %v17 = vld [vmem:[%s0 + $0x8] sm:$0xf]
  %v18 = vld [vmem:[%s0 + $0xc] sm:$0xf]
  %v19 = vld [vmem:[%s1] sm:$0xf]
  %v20 = vld [vmem:[%s1 + $0x4] sm:$0xf]
  %v21 = vld [vmem:[%s1 + $0x8] sm:$0xf]
  %v22 = vld [vmem:[%s1 + $0xc] sm:$0xf]
  %v23 = vld [vmem:[%s2] sm:$0x1]
  %v25 = vlaneseq
  %v26 = vshrl.u32 %v25, 7
  %v27 = vsub.s32 0, %v26
  %v28 = vrot.slane %v23, %v27
  %v34 = vunpack.c.l.b16 %v15
  %v35 = vunpack.c.l.b16 %v16
  %v36 = vunpack.c.l.b16 %v17
  %v37 = vunpack.c.l.b16 %v18
  %v38 = vpack.c.b16 %v35, %v34
  %v39 = vpack.c.b16 %v37, %v36
  %v44 = vunpack.c.l.b16 %v19
  %v45 = vunpack.c.l.b16 %v20
  %v46 = vunpack.c.l.b16 %v21
  %v47 = vunpack.c.l.b16 %v22
  %v48 = vpack.c.b16 %v45, %v44
  %v49 = vpack.c.b16 %v47, %v46
  %vm52 = vcmask 261120
  %v54 = vsel %vm52, %v38, 0
  %v57 = vsel %vm52, %v39, 0
  %59 = vmatprep.subr.bf16.mxu0 0
  %60 = vmatpush1.bf16.msra.mxu0 %v48
  %61 = vmatprep.subr.bf16.mxu0 0
  %62 = vmatpush1.bf16.msra.mxu0 %v49
  %63 = vmatprep.subr.bf16.mxu0 0
  %64 = vmatpush1.bf16.msra.mxu0 0
  %65 = vmatprep.subr.bf16.mxu0 0
  %66 = vmatpush1.bf16.msra.mxu0 0
  %67 = vmatprep.subr.bf16.mxu0 0
  %68 = vmatpush1.bf16.msra.mxu0 0
  %69 = vmatprep.subr.bf16.mxu0 0
  %70 = vmatpush1.bf16.msra.mxu0 0
  %71 = vmatprep.subr.bf16.mxu0 0
  %72 = vmatpush1.bf16.msra.mxu0 0
  %73 = vmatprep.subr.bf16.mxu0 0
  %74 = vmatpush1.bf16.msra.mxu0 0
  %75 = vmatprep.subr.bf16.mxu0 0
  %76 = vmatpush1.bf16.msra.mxu0 0
  %77 = vmatprep.subr.bf16.mxu0 0
  %78 = vmatpush1.bf16.msra.mxu0 0
  %79 = vmatprep.subr.bf16.mxu0 0
  %80 = vmatpush1.bf16.msra.mxu0 0
  %81 = vmatprep.subr.bf16.mxu0 0
  %82 = vmatpush1.bf16.msra.mxu0 0
  %83 = vmatprep.subr.bf16.mxu0 0
  %84 = vmatpush1.bf16.msra.mxu0 0
  %85 = vmatprep.subr.bf16.mxu0 0
  %86 = vmatpush1.bf16.msra.mxu0 0
  %87 = vmatprep.subr.bf16.mxu0 0
  %88 = vmatpush1.bf16.msra.mxu0 0
  %89 = vmatprep.subr.bf16.mxu0 0
  %90 = vmatpush1.bf16.msra.mxu0 0
  %91 = vmatprep.mubr.bf16.mxu0 0
  %92 = vmatmul.mubr.bf16.gmra.mrb[0].mxu0 %v54
  %v93 = vpop.f32.mrb[0].mxu0
  %v94 = vadd.f32 %v28, %v93
  %v95 = vpop.f32.mrb[0].mxu0
  %v96 = vpop.f32.mrb[0].mxu0
  %v97 = vadd.f32 %v28, %v96
  %v98 = vpop.f32.mrb[0].mxu0
  %99 = vmatprep.mubr.bf16.mxu0 0
  %100 = vmatmul.mubr.bf16.gmra.mrb[0].mxu0 %v57
  %v101 = vpop.f32.mrb[0].mxu0
  %v102 = vadd.f32 %v28, %v101
  %v103 = vpop.f32.mrb[0].mxu0
  %v104 = vpop.f32.mrb[0].mxu0
  %v105 = vadd.f32 %v28, %v104
  %v106 = vpop.f32.mrb[0].mxu0
  %107 = vdwg.mxu0
  %v108 = vpack.c.bf16 %v97, %v94
  %v109 = vpack.c.bf16 %v105, %v102
  %v112 = vunpack.c.l.b16 %v108
  %v113 = vunpack.c.h.b16 %v108
  %v114 = vunpack.c.l.b16 %v109
  %v115 = vunpack.c.h.b16 %v109
  %v116 = vpack.c.b16 %v112, %v112
  %v117 = vpack.c.b16 %v113, %v113
  %v118 = vpack.c.b16 %v114, %v114
  %v119 = vpack.c.b16 %v115, %v115
  %vm124 = vcmask 519168
  %125 = vst.msk [vmem:[%s3] sm:$0xf] %vm124, %v116
  %126 = vst.msk [vmem:[%s3 + $0x4] sm:$0xf] %vm124, %v117
  %127 = vst.msk [vmem:[%s3 + $0x8] sm:$0xf] %vm124, %v118
  %128 = vst.msk [vmem:[%s3 + $0xc] sm:$0xf] %vm124, %v119
  // Predicated region
  $region14: #{text_decoder_forward.32} parent=0 // pred_check
    _
  $region15: #{text_decoder_forward.32} parent=0 // pred_check_branch
    %130 = sbr.rel (0) target = $region17
  $region16: #{text_decoder_forward.32} parent=0 // pred_region
    _
  $region17: #{text_decoder_forward.32} parent=0 // pred_fallthru
    _
  // Predicated region
  $region18: #{text_decoder_forward.32} parent=0 // pred_check
    _
  $region19: #{text_decoder_forward.32} parent=0 // pred_check_branch
    %132 = sbr.rel (0) target = $region21
  $region20: #{text_decoder_forward.32} parent=0 // pred_region
    _
  $region21: #{text_decoder_forward.32} parent=0 // pred_fallthru
    _

// kernel: text_decoder_forward.36
$region0: #{text_decoder_forward.36}
  #allocation0 [shape = 'u32[]', space=smem, size = 0x4, offset = 0x4, fixed_abs, tag = 'smem constant byte address 0x4 - core index']
  #allocation1 [shape = 'u32[144,128]{1,0:T(1,128)}', space=vmem, size = 0x12000, scoped, tag = 'internal scratch']
  %s0 = inlined_call_operand.vmem [shape: bf16[16,32], index: 0, kind: input, shape index: {}]
  %s1 = inlined_call_operand.vmem [shape: bf16[32,128], index: 1, kind: input, shape index: {}]
  %s2 = inlined_call_operand.vmem [shape: f32[1,128], index: 2, kind: input, shape index: {}]
  %s3 = inlined_call_operand.vmem [shape: bf16[16,128], index: 3, kind: output, shape index: {}]
  %s4 = sld [smem:[#allocation0]]
  $region22: #{text_decoder_forward.36} parent=0
    _
  %s6 = ssub.s32 1, %s4
  %s7 = scalar_select 0, %s6, %s4
  // Predicated region
  $region2: #{text_decoder_forward.36} parent=0 // pred_check
    _
  $region3: #{text_decoder_forward.36} parent=0 // pred_check_branch
    %9 = sbr.rel (0) target = $region5
  $region4: #{text_decoder_forward.36} parent=0 // pred_region
    _
  $region5: #{text_decoder_forward.36} parent=0 // pred_fallthru
    _
  // Predicated region
  $region6: #{text_decoder_forward.36} parent=0 // pred_check
    _
  $region7: #{text_decoder_forward.36} parent=0 // pred_check_branch
    %11 = sbr.rel (0) target = $region9
  $region8: #{text_decoder_forward.36} parent=0 // pred_region
    _
  $region9: #{text_decoder_forward.36} parent=0 // pred_fallthru
    _
  // Predicated region
  $region10: #{text_decoder_forward.36} parent=0 // pred_check
    _
  $region11: #{text_decoder_forward.36} parent=0 // pred_check_branch
    %13 = sbr.rel (0) target = $region13
  $region12: #{text_decoder_forward.36} parent=0 // pred_region
    _
  $region13: #{text_decoder_forward.36} parent=0 // pred_fallthru
    _
  %v15 = vld [vmem:[%s0] sm:$0xf]
  %v16 = vld [vmem:[%s0 + $0x4] sm:$0xf]
  %v17 = vld [vmem:[%s1] sm:$0xf]
  %v18 = vld [vmem:[%s1 + $0x4] sm:$0xf]
  %v19 = vld [vmem:[%s1 + $0x8] sm:$0xf]
  %v20 = vld [vmem:[%s1 + $0xc] sm:$0xf]
  %v21 = vld [vmem:[%s2] sm:$0x1]
  %v23 = vlaneseq
  %v24 = vshrl.u32 %v23, 7
  %v25 = vsub.s32 0, %v24
  %v26 = vrot.slane %v21, %v25
  %v30 = vunpack.c.l.b16 %v15
  %v31 = vunpack.c.l.b16 %v16
  %v32 = vpack.c.b16 %v31, %v30
  %v37 = vunpack.c.l.b16 %v17
  %v38 = vunpack.c.l.b16 %v18
  %v39 = vunpack.c.l.b16 %v19
  %v40 = vunpack.c.l.b16 %v20
  %v41 = vpack.c.b16 %v38, %v37
  %v42 = vpack.c.b16 %v40, %v39
  %vm45 = vcmask 261120
  %v47 = vsel %vm45, %v32, 0
  %49 = vmatprep.subr.bf16.mxu0 0
  %50 = vmatpush1.bf16.msra.mxu0 %v41
  %51 = vmatprep.subr.bf16.mxu0 0
  %52 = vmatpush1.bf16.msra.mxu0 %v42
  %53 = vmatprep.subr.bf16.mxu0 0
  %54 = vmatpush1.bf16.msra.mxu0 0
  %55 = vmatprep.subr.bf16.mxu0 0
  %56 = vmatpush1.bf16.msra.mxu0 0
  %57 = vmatprep.subr.bf16.mxu0 0
  %58 = vmatpush1.bf16.msra.mxu0 0
  %59 = vmatprep.subr.bf16.mxu0 0
  %60 = vmatpush1.bf16.msra.mxu0 0
  %61 = vmatprep.subr.bf16.mxu0 0
  %62 = vmatpush1.bf16.msra.mxu0 0
  %63 = vmatprep.subr.bf16.mxu0 0
  %64 = vmatpush1.bf16.msra.mxu0 0
  %65 = vmatprep.subr.bf16.mxu0 0
  %66 = vmatpush1.bf16.msra.mxu0 0
  %67 = vmatprep.subr.bf16.mxu0 0
  %68 = vmatpush1.bf16.msra.mxu0 0
  %69 = vmatprep.subr.bf16.mxu0 0
  %70 = vmatpush1.bf16.msra.mxu0 0
  %71 = vmatprep.subr.bf16.mxu0 0
  %72 = vmatpush1.bf16.msra.mxu0 0
  %73 = vmatprep.subr.bf16.mxu0 0
  %74 = vmatpush1.bf16.msra.mxu0 0
  %75 = vmatprep.subr.bf16.mxu0 0
  %76 = vmatpush1.bf16.msra.mxu0 0
  %77 = vmatprep.subr.bf16.mxu0 0
  %78 = vmatpush1.bf16.msra.mxu0 0
  %79 = vmatprep.subr.bf16.mxu0 0
  %80 = vmatpush1.bf16.msra.mxu0 0
  %81 = vmatprep.mubr.bf16.mxu0 0
  %82 = vmatmul.mubr.bf16.gmra.mrb[0].mxu0 %v47
  %v83 = vpop.f32.mrb[0].mxu0
  %v84 = vadd.f32 %v26, %v83
  %v85 = vpop.f32.mrb[0].mxu0
  %v86 = vpop.f32.mrb[0].mxu0
  %v87 = vadd.f32 %v26, %v86
  %v88 = vpop.f32.mrb[0].mxu0
  %89 = vdwg.mxu0
  %v90 = vmul.f32 %v84, 0.5
  %v91 = vmul.f32 %v87, 0.5
  %v92 = vmul.f32 %v84, 0.70710677
  %v93 = vmul.f32 %v87, 0.70710677
  %vm94 = vcmp.ge.f32.partialorder %v92, 0.0
  %vm95 = vcmp.ge.f32.partialorder %v93, 0.0
  %v96 = vsel %vm94, 1.0, -1.0
  %v97 = vsel %vm95, 1.0, -1.0
  %v98 = vand.u32 2147483647, %v92
  %v99 = vand.u32 2147483647, %v93
  %v100 = vmul.f32 %v98, 0.3275911
  %v101 = vmul.f32 %v99, 0.3275911
  %v102 = vadd.f32 %v100, 1.0
  %v103 = vadd.f32 %v101, 1.0
  %v104 = vrcp.pop %v102
  %v105 = vmul.f32 1.0, %v104
  %v106 = vrcp.pop %v103
  %v107 = vmul.f32 1.0, %v106
  %v108 = vmul.f32 %v105, 1.0614054
  %v109 = vmul.f32 %v107, 1.0614054
  %v110 = vadd.f32 %v108, -1.4531521
  %v111 = vadd.f32 %v109, -1.4531521
  %v112 = vmul.f32 %v110, %v105
  %v113 = vmul.f32 %v111, %v107
  %v114 = vadd.f32 %v112, 1.4214138
  %v115 = vadd.f32 %v113, 1.4214138
  %v116 = vmul.f32 %v114, %v105
  %v117 = vmul.f32 %v115, %v107
  %v118 = vadd.f32 %v116, -0.28449672
  %v119 = vadd.f32 %v117, -0.28449672
  %v120 = vmul.f32 %v118, %v105
  %v121 = vmul.f32 %v119, %v107
  %v122 = vadd.f32 %v120, 0.2548296
  %v123 = vadd.f32 %v121, 0.2548296
  %v124 = vmul.f32 %v122, %v105
  %v125 = vmul.f32 %v123, %v107
  %v126 = vsub.f32 0.0, %v98
  %v127 = vsub.f32 0.0, %v99
  %v128 = vmul.f32 %v126, %v98
  %v129 = vmul.f32 %v127, %v99
  %v130 = vmul.f32 %v128, 1.442695
  %v131 = vpow.pop %v130
  %v132 = vmul.f32 %v129, 1.442695
  %v133 = vpow.pop %v132
  %v134 = vmul.f32 %v124, %v131
  %v135 = vmul.f32 %v125, %v133
  %v136 = vsub.f32 1.0, %v134
  %v137 = vsub.f32 1.0, %v135
  %v138 = vmul.f32 %v96, %v136
  %v139 = vmul.f32 %v97, %v137
  %v140 = vadd.f32 %v138, 1.0
  %v141 = vadd.f32 %v139, 1.0
  %v142 = vmul.f32 %v90, %v140
  %v143 = vmul.f32 %v91, %v141
  %v144 = vpack.c.bf16 %v143, %v142
  %v146 = vunpack.c.l.b16 %v144
  %v147 = vunpack.c.h.b16 %v144
  %v148 = vpack.c.b16 %v146, %v146
  %v149 = vpack.c.b16 %v147, %v147
  %152 = vst [vmem:[%s3] sm:$0xf] %v148
  %153 = vst [vmem:[%s3 + $0x4] sm:$0xf] %v149
  // Predicated region
  $region14: #{text_decoder_forward.36} parent=0 // pred_check
    _
  $region15: #{text_decoder_forward.36} parent=0 // pred_check_branch
    %155 = sbr.rel (0) target = $region17
  $region16: #{text_decoder_forward.36} parent=0 // pred_region
    _
  $region17: #{text_decoder_forward.36} parent=0 // pred_fallthru
    _
  // Predicated region
  $region18: #{text_decoder_forward.36} parent=0 // pred_check
    _
  $region19: #{text_decoder_forward.36} parent=0 // pred_check_branch
    %157 = sbr.rel (0) target = $region21
  $region20: #{text_decoder_forward.36} parent=0 // pred_region
    _
  $region21: #{text_decoder_forward.36} parent=0 // pred_fallthru
    _

// kernel: text_decoder_forward.33
$region0: #{text_decoder_forward.33}
  #allocation0 [shape = 'u32[]', space=smem, size = 0x4, offset = 0x4, fixed_abs, tag = 'smem constant byte address 0x4 - core index']
  #allocation1 [shape = 'u32[144,128]{1,0:T(1,128)}', space=vmem, size = 0x12000, scoped, tag = 'internal scratch']
  #allocation2 [shape = 'f32[8,1]{1,0:T(8,128)}', space=vmem, size = 0x1000, scoped, tag = 'scratch operand']
  #allocation3 [shape = 'f32[8,1]{1,0:T(8,128)}', space=vmem, size = 0x1000, scoped, tag = 'scratch operand']
  #allocation4 [shape = 'f32[8,8]{1,0:T(8,128)}', space=vmem, size = 0x1000, scoped, tag = 'scratch operand']
  %s0 = inlined_call_operand.vmem [shape: bf16[8,8,8], index: 0, kind: input, shape index: {}]
  %s1 = inlined_call_operand.vmem [shape: bf16[8,16,8], index: 1, kind: input, shape index: {}]
  %s2 = inlined_call_operand.vmem [shape: bf16[8,16,8], index: 2, kind: input, shape index: {}]
  %s3 = inlined_call_operand.vmem [shape: bf16[8,8,8], index: 3, kind: output, shape index: {}]
  %s4 = sld [smem:[#allocation0]]
  $region53: #{text_decoder_forward.33} parent=0
    _
  %s6 = ssub.s32 1, %s4
  %s7 = scalar_select 0, %s6, %s4
  loop: start=0, step=1, limit=10
  $region2: #{text_decoder_forward.33} parent=0 // loop_pre_header
    _
  $region3: #{text_decoder_forward.33} parent=0 // loop_header
    %s9 = sphi 0, %s13
    %p10 = scmp.ge.s32.totalorder %s9, 10
    %s16 = sphi 0, %s28
    %s17 = sphi 0, %s24
    %s18 = sphi 0, %s16
    %s19 = sphi 0, %s17
    %s20 = sphi 0, %s18
    %s21 = sphi 0, %s19
    %s31 = sphi 0, %s33
    %s34 = sphi 0, %s31
    %s35 = sphi 0, %s34
    %s51 = sphi 0, %s35
    %s59 = sphi 0, %s61
    %s62 = sphi 0, %s59
    %s63 = sphi 0, %s62
    %s79 = sphi 0, %s63
    %s87 = sphi 0, %s89
    %s90 = sphi 0, %s87
    %s91 = sphi 0, %s90
    %s107 = sphi 0, %s91
    %s113 = sphi 0, %s115
    %s116 = sphi 0, %s113
    %s117 = sphi 0, %s116
    %s133 = sphi 0, %s117
  $region4: #{text_decoder_forward.33} parent=0 // loop_header_branch
    %12 = sbr.rel (%p10) target = $region8
  $region5: #{text_decoder_forward.33} parent=0 // loop_body
    %s14 = ssub.s32 %s9, 1
    %s15 = ssub.s32 %s9, 2
    %s22 = sadd.s32 1, %s17
    %p23 = scmp.ge.s32.totalorder %s22, 1
    %s24 = scalar_select %p23, 0, %s22
    %s25 = sadd.s32 1, %s16
    %s26 = scalar_select %p23, %s25, %s16
    %p27 = scmp.ge.s32.totalorder %s26, 8
    %s28 = scalar_select %p27, 0, %s26
    %s29 = ssub.s32 %s16, %s28
    %p30 = scmp.eq.s32.totalorder %s29, 0
    %s32 = sadd.s32 %s31, 1
    %s33 = scalar_select %p30, %s31, %s32
    %p36 = pneg %p30
    %p37 = scmp.eq.s32.totalorder %s9, 7
    %p38 = por %p36, %p37
    %p39 = scmp.ne.s32.totalorder %s31, %s34
    %p40 = scmp.eq.s32.totalorder %s9, 0
    %p41 = por %p39, %p40
    %p42 = scmp.ne.s32.totalorder %s31, %s34
    %p43 = scmp.eq.s32.totalorder %s14, 7
    %p44 = por %p42, %p43
    %p45 = scmp.ne.s32.totalorder %s34, %s35
    %p46 = scmp.eq.s32.totalorder %s14, 0
    %p47 = por %p45, %p46
    %p48 = scmp.ne.s32.totalorder %s34, %s35
    %p49 = scmp.eq.s32.totalorder %s15, 7
    %p50 = por %p48, %p49
    %p52 = scmp.ne.s32.totalorder %s35, %s51
    %p53 = scmp.eq.s32.totalorder %s15, 0
    %p54 = por %p52, %p53
    %s55 = ssub.s32 %s16, %s28
    %s56 = ssub.s32 %s17, %s24
    %s57 = sor.u32 %s55, %s56
    %p58 = scmp.eq.s32.totalorder %s57, 0
    %s60 = sadd.s32 %s59, 1
    %s61 = scalar_select %p58, %s59, %s60
    %p64 = pneg %p58
    %p65 = scmp.eq.s32.totalorder %s9, 7
    %p66 = por %p64, %p65
    %p67 = scmp.ne.s32.totalorder %s59, %s62
    %p68 = scmp.eq.s32.totalorder %s9, 0
    %p69 = por %p67, %p68
    %p70 = scmp.ne.s32.totalorder %s59, %s62
    %p71 = scmp.eq.s32.totalorder %s14, 7
    %p72 = por %p70, %p71
    %p73 = scmp.ne.s32.totalorder %s62, %s63
    %p74 = scmp.eq.s32.totalorder %s14, 0
    %p75 = por %p73, %p74
    %p76 = scmp.ne.s32.totalorder %s62, %s63
    %p77 = scmp.eq.s32.totalorder %s15, 7
    %p78 = por %p76, %p77
    %p80 = scmp.ne.s32.totalorder %s63, %s79
    %p81 = scmp.eq.s32.totalorder %s15, 0
    %p82 = por %p80, %p81
    %s83 = ssub.s32 %s16, %s28
    %s84 = ssub.s32 %s17, %s24
    %s85 = sor.u32 %s83, %s84
    %p86 = scmp.eq.s32.totalorder %s85, 0
    %s88 = sadd.s32 %s87, 1
    %s89 = scalar_select %p86, %s87, %s88
    %p92 = pneg %p86
    %p93 = scmp.eq.s32.totalorder %s9, 7
    %p94 = por %p92, %p93
    %p95 = scmp.ne.s32.totalorder %s87, %s90
    %p96 = scmp.eq.s32.totalorder %s9, 0
    %p97 = por %p95, %p96
    %p98 = scmp.ne.s32.totalorder %s87, %s90
    %p99 = scmp.eq.s32.totalorder %s14, 7
    %p100 = por %p98, %p99
    %p101 = scmp.ne.s32.totalorder %s90, %s91
    %p102 = scmp.eq.s32.totalorder %s14, 0
    %p103 = por %p101, %p102
    %p104 = scmp.ne.s32.totalorder %s90, %s91
    %p105 = scmp.eq.s32.totalorder %s15, 7
    %p106 = por %p104, %p105
    %p108 = scmp.ne.s32.totalorder %s91, %s107
    %p109 = scmp.eq.s32.totalorder %s15, 0
    %p110 = por %p108, %p109
    %s111 = ssub.s32 %s16, %s28
    %p112 = scmp.eq.s32.totalorder %s111, 0
    %s114 = sadd.s32 %s113, 1
    %s115 = scalar_select %p112, %s113, %s114
    %p118 = pneg %p112
    %p119 = scmp.eq.s32.totalorder %s9, 7
    %p120 = por %p118, %p119
    %p121 = scmp.ne.s32.totalorder %s113, %s116
    %p122 = scmp.eq.s32.totalorder %s9, 0
    %p123 = por %p121, %p122
    %p124 = scmp.ne.s32.totalorder %s113, %s116
    %p125 = scmp.eq.s32.totalorder %s14, 7
    %p126 = por %p124, %p125
    %p127 = scmp.ne.s32.totalorder %s116, %s117
    %p128 = scmp.eq.s32.totalorder %s14, 0
    %p129 = por %p127, %p128
    %p130 = scmp.ne.s32.totalorder %s116, %s117
    %p131 = scmp.eq.s32.totalorder %s15, 7
    %p132 = por %p130, %p131
    %p134 = scmp.ne.s32.totalorder %s117, %s133
    %p135 = scmp.eq.s32.totalorder %s15, 0
    %p136 = por %p134, %p135
    %p137 = scmp.le.s32.totalorder 1, %s9
    %p138 = scmp.lt.s32.totalorder %s9, 9
    %p139 = pnand %p137, %p138
    %p140 = pneg %p139
    // Predicated region
    $region9: #{text_decoder_forward.33} parent=5 // pred_check
      _
    $region10: #{text_decoder_forward.33} parent=5 // pred_check_branch
      %142 = sbr.rel (%p139) target = $region12
    $region11: #{text_decoder_forward.33} parent=5 // pred_region
      %s143 = ssub.s32 %s9, 1
    $region12: #{text_decoder_forward.33} parent=5 // pred_fallthru
      _
    %p144 = scmp.lt.s32.totalorder %s9, 8
    // Predicated region
    $region13: #{text_decoder_forward.33} parent=5 // pred_check
      %p145 = pneg %p144
    $region14: #{text_decoder_forward.33} parent=5 // pred_check_branch
      %147 = sbr.rel (%p145) target = $region16
    $region15: #{text_decoder_forward.33} parent=5 // pred_region
      // Predicated region
      $region17: #{text_decoder_forward.33} parent=15 // pred_check
        %p148 = pneg %p41
      $region18: #{text_decoder_forward.33} parent=15 // pred_check_branch
        %150 = sbr.rel (%p148) target = $region20
      $region19: #{text_decoder_forward.33} parent=15 // pred_region
        %p151 = scmp.lt.s32.totalorder %s16, 7
        %s152 = scalar_select %p151, %s16, 7
        %s153 = smul.addr %s152, 4
        %s154 = scalar_lea.vmem %s0, %s153
      $region20: #{text_decoder_forward.33} parent=15 // pred_fallthru
        _
      // Predicated region
      $region21: #{text_decoder_forward.33} parent=15 // pred_check
        %p155 = pneg %p69
      $region22: #{text_decoder_forward.33} parent=15 // pred_check_branch
        %157 = sbr.rel (%p155) target = $region24
      $region23: #{text_decoder_forward.33} parent=15 // pred_region
        %s158 = smul.u32 2, %s17
        %p159 = scmp.lt.s32.totalorder %s16, 7
        %s160 = scalar_select %p159, %s16, 7
        %p161 = scmp.lt.s32.totalorder %s158, 1
        %s162 = scalar_select %p161, %s158, 1
        %s163 = smul.addr %s160, 2
        %s164 = sadd.s32 %s162, %s163
        %s165 = smul.addr %s164, 4
        %s166 = scalar_lea.vmem %s1, %s165
        %s167 = smul.u32 2, %s17
      $region24: #{text_decoder_forward.33} parent=15 // pred_fallthru
        _
      // Predicated region
      $region25: #{text_decoder_forward.33} parent=15 // pred_check
        %p168 = pneg %p97
      $region26: #{text_decoder_forward.33} parent=15 // pred_check_branch
        %170 = sbr.rel (%p168) target = $region28
      $region27: #{text_decoder_forward.33} parent=15 // pred_region
        %s171 = smul.u32 2, %s17
        %p172 = scmp.lt.s32.totalorder %s16, 7
        %s173 = scalar_select %p172, %s16, 7
        %p174 = scmp.lt.s32.totalorder %s171, 1
        %s175 = scalar_select %p174, %s171, 1
        %s176 = smul.addr %s173, 2
        %s177 = sadd.s32 %s175, %s176
        %s178 = smul.addr %s177, 4
        %s179 = scalar_lea.vmem %s2, %s178
        %s180 = smul.u32 2, %s17
      $region28: #{text_decoder_forward.33} parent=15 // pred_fallthru
        _
    $region16: #{text_decoder_forward.33} parent=5 // pred_fallthru
      _
    %p181 = scmp.le.s32.totalorder 1, %s9
    %p182 = scmp.lt.s32.totalorder %s9, 9
    %p183 = pnand %p181, %p182
    %p184 = pneg %p183
    // Predicated region
    $region29: #{text_decoder_forward.33} parent=5 // pred_check
      _
    $region30: #{text_decoder_forward.33} parent=5 // pred_check_branch
      %186 = sbr.rel (%p183) target = $region32
    $region31: #{text_decoder_forward.33} parent=5 // pred_region
      %s187 = ssub.s32 %s9, 1
      %p188 = scmp.lt.s32.totalorder %s18, 7
      %s189 = scalar_select %p188, %s18, 7
      %s190 = smul.addr %s189, 4
      %s191 = scalar_lea.vmem %s0, %s190
      %p192 = pneg %p47
      %p193 = pneg %p44
      %s194 = smul.u32 2, %s19
      %p195 = scmp.lt.s32.totalorder %s18, 7
      %s196 = scalar_select %p195, %s18, 7
      %p197 = scmp.lt.s32.totalorder %s194, 1
      %s198 = scalar_select %p197, %s194, 1
      %s199 = smul.addr %s196, 2
      %s200 = sadd.s32 %s198, %s199
      %s201 = smul.addr %s200, 4
      %s202 = scalar_lea.vmem %s1, %s201
      %p203 = pneg %p75
      %p204 = pneg %p72
      %s205 = smul.u32 2, %s19
      %p206 = scmp.lt.s32.totalorder %s18, 7
      %s207 = scalar_select %p206, %s18, 7
      %p208 = scmp.lt.s32.totalorder %s205, 1
      %s209 = scalar_select %p208, %s205, 1
      %s210 = smul.addr %s207, 2
      %s211 = sadd.s32 %s209, %s210
      %s212 = smul.addr %s211, 4
      %s213 = scalar_lea.vmem %s2, %s212
      %p214 = pneg %p103
      %p215 = pneg %p100
      %p216 = pneg %p129
      %p217 = pneg %p126
      %p218 = scmp.lt.s32.totalorder %s18, 7
      %s219 = scalar_select %p218, %s18, 7
      %s220 = smul.addr %s219, 4
      %s221 = scalar_lea.vmem %s3, %s220
      %p222 = scmp.lt.s32.totalorder %s18, 7
      %s223 = scalar_select %p222, %s18, 7
      %s224 = smul.addr %s223, 4
      %s225 = scalar_lea.vmem %s0, %s224
      %s226 = smul.u32 2, %s19
      %p227 = scmp.lt.s32.totalorder %s18, 7
      %s228 = scalar_select %p227, %s18, 7
      %p229 = scmp.lt.s32.totalorder %s226, 1
      %s230 = scalar_select %p229, %s226, 1
      %s231 = smul.addr %s228, 2
      %s232 = sadd.s32 %s230, %s231
      %s233 = smul.addr %s232, 4
      %s234 = scalar_lea.vmem %s1, %s233
      %s235 = smul.u32 2, %s19
      %s236 = smul.u32 2, %s19
      %p237 = scmp.lt.s32.totalorder %s18, 7
      %s238 = scalar_select %p237, %s18, 7
      %p239 = scmp.lt.s32.totalorder %s236, 1
      %s240 = scalar_select %p239, %s236, 1
      %s241 = smul.addr %s238, 2
      %s242 = sadd.s32 %s240, %s241
      %s243 = smul.addr %s242, 4
      %s244 = scalar_lea.vmem %s2, %s243
      %s245 = smul.u32 2, %s19
      %p246 = scmp.lt.s32.totalorder %s18, 7
      %s247 = scalar_select %p246, %s18, 7
      %s248 = smul.addr %s247, 4
      %s249 = scalar_lea.vmem %s3, %s248
      %p251 = scmp.eq.s32.totalorder %s19, 0
      // Predicated region
      $region33: #{text_decoder_forward.33} parent=31 // pred_check
        %p252 = pneg %p251
      $region34: #{text_decoder_forward.33} parent=31 // pred_check_branch
        %254 = sbr.rel (%p252) target = $region36
      $region35: #{text_decoder_forward.33} parent=31 // pred_region
        %vm255 = vcmask 7168
        %256 = vst.msk [vmem:[#allocation2] sm:$0xff] %vm255, -1e+30
        %257 = vst.msk [vmem:[#allocation3] sm:$0xff] %vm255, 0.0
        %vm258 = vcmask 64512
        %259 = vst.msk [vmem:[#allocation4] sm:$0xff] %vm258, 0.0
      $region36: #{text_decoder_forward.33} parent=31 // pred_fallthru
        _
      %v260 = vld [vmem:[%s225] sm:$0xf]
      %v261 = vld [vmem:[%s234] sm:$0xf]
      %v262 = vld [vmem:[%s234 + $0x4] sm:$0xf]
      %v263 = vld [vmem:[%s244] sm:$0xf]
      %v264 = vld [vmem:[%s244 + $0x4] sm:$0xf]
      %v267 = vunpack.c.l.b16 %v261
      %v268 = vunpack.c.l.b16 %v262
      %v269 = vpack.c.b16 %v268, %v267
      %vm270 = vcmask 64512
      %v272 = vsel %vm270, %v260, 0
      %v275 = vsel %vm270, %v269, 0
      %277 = vmatprep.subr.bf16.mxu0 0
      %278 = vmatpush1.bf16.xpose.msra.mxu0 %v275
      %279 = vmatprep.subr.bf16.mxu0 0
      %280 = vmatpush1.bf16.xpose.msra.mxu0 0
      %281 = vmatprep.subr.bf16.mxu0 0
      %282 = vmatpush1.bf16.xpose.msra.mxu0 0
      %283 = vmatprep.subr.bf16.mxu0 0
      %284 = vmatpush1.bf16.xpose.msra.mxu0 0
      %285 = vmatprep.subr.bf16.mxu0 0
      %286 = vmatpush1.bf16.xpose.msra.mxu0 0
      %287 = vmatprep.subr.bf16.mxu0 0
      %288 = vmatpush1.bf16.xpose.msra.mxu0 0
      %289 = vmatprep.subr.bf16.mxu0 0
      %290 = vmatpush1.bf16.xpose.msra.mxu0 0
      %291 = vmatprep.subr.bf16.mxu0 0
      %292 = vmatpush1.bf16.xpose.msra.mxu0 0
      %293 = vmatprep.subr.bf16.mxu0 0
      %294 = vmatpush1.bf16.xpose.msra.mxu0 0
      %295 = vmatprep.subr.bf16.mxu0 0
      %296 = vmatpush1.bf16.xpose.msra.mxu0 0
      %297 = vmatprep.subr.bf16.mxu0 0
      %298 = vmatpush1.bf16.xpose.msra.mxu0 0
      %299 = vmatprep.subr.bf16.mxu0 0
      %300 = vmatpush1.bf16.xpose.msra.mxu0 0
      %301 = vmatprep.subr.bf16.mxu0 0
      %302 = vmatpush1.bf16.xpose.msra.mxu0 0
      %303 = vmatprep.subr.bf16.mxu0 0
      %304 = vmatpush1.bf16.xpose.msra.mxu0 0
      %305 = vmatprep.subr.bf16.mxu0 0
      %306 = vmatpush1.bf16.xpose.msra.mxu0 0
      %307 = vmatprep.subr.bf16.mxu0 0
      %308 = vmatpush1.bf16.xpose.msra.mxu0 0
      %309 = vmatprep.mubr.bf16.mxu0 0
      %310 = vmatmul.mubr.bf16.gmra.mrb[0].mxu0 %v272
      %v311 = vpop.f32.mrb[0].mxu0
      %v312 = vadd.f32 0.0, %v311
      %v313 = vpop.f32.mrb[0].mxu0
      %v314 = vpop.f32.mrb[0].mxu0
      %v315 = vpop.f32.mrb[0].mxu0
      %316 = vdwg.mxu0
      %v317 = vmul.f32 %v312, 0.35355338
      %v318 = vld [vmem:[#allocation2] sm:$0xff]
      %vm319 = vcmask 130048
      %v320 = vsel %vm319, %v317, -inf
      %321 = vmax.xlane.f32.xlu0 %v320
      %v322 = vpop.xlane.xlu0 %321
      %v323 = vmax.f32 %v318, %v322
      %v324 = vsub.f32 %v318, %v323
      %v325 = vmul.f32 %v324, 1.442695
      %v326 = vpow.pop %v325
      %328 = vset.pattern.permute.xlu0 0
      %329 = vperm.xlu0 %328, %v323
      %v330 = vpop.permute.xlu0 %329
      %v332 = vsub.f32 %v317, %v330
      %v333 = vmul.f32 %v332, 1.442695
      %v334 = vpow.pop %v333
      %v335 = vld [vmem:[#allocation3] sm:$0xff]
      %v336 = vmul.f32 %v326, %v335
      %v337 = vsel %vm319, %v334, 0.0
      %338 = vadd.xlane.f32.xlu0 %v337
      %v339 = vpop.xlane.xlu0 %338
      %v340 = vadd.f32 %v336, %v339
      %vm341 = vcmask 7168
      %342 = vst.msk [vmem:[#allocation3] sm:$0xff] %vm341, %v340
      %v343 = vld [vmem:[#allocation4] sm:$0xff]
      %345 = vset.pattern.permute.xlu0 0
      %346 = vperm.xlu0 %345, %v326
      %v347 = vpop.permute.xlu0 %346
      %v349 = vmul.f32 %v347, %v343
      %v350 = vpack.c.bf16 %v334, %v334
      %v353 = vunpack.c.l.b16 %v263
      %v354 = vunpack.c.l.b16 %v264
      %v355 = vpack.c.b16 %v354, %v353
      %v358 = vsel %vm319, %v350, 0
      %360 = vmatprep.subr.bf16.mxu0 0
      %361 = vmatpush1.bf16.msra.mxu0 %v355
      %362 = vmatprep.subr.bf16.mxu0 0
      %363 = vmatpush1.bf16.msra.mxu0 0
      %364 = vmatprep.subr.bf16.mxu0 0
      %365 = vmatpush1.bf16.msra.mxu0 0
      %366 = vmatprep.subr.bf16.mxu0 0
      %367 = vmatpush1.bf16.msra.mxu0 0
      %368 = vmatprep.subr.bf16.mxu0 0
      %369 = vmatpush1.bf16.msra.mxu0 0
      %370 = vmatprep.subr.bf16.mxu0 0
      %371 = vmatpush1.bf16.msra.mxu0 0
      %372 = vmatprep.subr.bf16.mxu0 0
      %373 = vmatpush1.bf16.msra.mxu0 0
      %374 = vmatprep.subr.bf16.mxu0 0
      %375 = vmatpush1.bf16.msra.mxu0 0
      %376 = vmatprep.subr.bf16.mxu0 0
      %377 = vmatpush1.bf16.msra.mxu0 0
      %378 = vmatprep.subr.bf16.mxu0 0
      %379 = vmatpush1.bf16.msra.mxu0 0
      %380 = vmatprep.subr.bf16.mxu0 0
      %381 = vmatpush1.bf16.msra.mxu0 0
      %382 = vmatprep.subr.bf16.mxu0 0
      %383 = vmatpush1.bf16.msra.mxu0 0
      %384 = vmatprep.subr.bf16.mxu0 0
      %385 = vmatpush1.bf16.msra.mxu0 0
      %386 = vmatprep.subr.bf16.mxu0 0
      %387 = vmatpush1.bf16.msra.mxu0 0
      %388 = vmatprep.subr.bf16.mxu0 0
      %389 = vmatpush1.bf16.msra.mxu0 0
      %390 = vmatprep.subr.bf16.mxu0 0
      %391 = vmatpush1.bf16.msra.mxu0 0
      %392 = vmatprep.mubr.bf16.mxu0 0
      %393 = vmatmul.mubr.bf16.gmra.mrb[0].mxu0 %v358
      %v394 = vpop.f32.mrb[0].mxu0
      %v395 = vadd.f32 0.0, %v394
      %v396 = vpop.f32.mrb[0].mxu0
      %v397 = vpop.f32.mrb[0].mxu0
      %v398 = vpop.f32.mrb[0].mxu0
      %399 = vdwg.mxu0
      %v400 = vadd.f32 %v349, %v395
      %401 = vst.msk [vmem:[#allocation4] sm:$0xff] %vm270, %v400
      %402 = vst.msk [vmem:[#allocation2] sm:$0xff] %vm341, %v323
      // Predicated region
      $region37: #{text_decoder_forward.33} parent=31 // pred_check
        %p403 = pneg %p251
      $region38: #{text_decoder_forward.33} parent=31 // pred_check_branch
        %405 = sbr.rel (%p403) target = $region40
      $region39: #{text_decoder_forward.33} parent=31 // pred_region
        %v406 = vld [vmem:[#allocation4] sm:$0xff]
        %v407 = vld [vmem:[#allocation3] sm:$0xff]
        %v408 = vrcp.pop %v407
        %410 = vset.pattern.permute.xlu0 0
        %411 = vperm.xlu0 %410, %v408
        %v412 = vpop.permute.xlu0 %411
        %v414 = vmul.f32 %v406, %v412
        %v415 = vpack.c.bf16 %v414, %v414
        %vm416 = vcmask 60416
        %417 = vst.msk [vmem:[%s249] sm:$0xf] %vm416, %v415
      $region40: #{text_decoder_forward.33} parent=31 // pred_fallthru
        _
      %p418 = scmp.lt.s32.totalorder %s18, 7
      %s419 = scalar_select %p418, %s18, 7
      %s420 = smul.addr %s419, 4
      %s421 = scalar_lea.vmem %s3, %s420
      // Predicated region
      $region41: #{text_decoder_forward.33} parent=31 // pred_check
        %p422 = pneg %p126
      $region42: #{text_decoder_forward.33} parent=31 // pred_check_branch
        %424 = sbr.rel (%p422) target = $region44
      $region43: #{text_decoder_forward.33} parent=31 // pred_region
        _
      $region44: #{text_decoder_forward.33} parent=31 // pred_fallthru
        _
    $region32: #{text_decoder_forward.33} parent=5 // pred_fallthru
      _
    %p425 = scmp.le.s32.totalorder 2, %s9
    // Predicated region
    $region45: #{text_decoder_forward.33} parent=5 // pred_check
      %p426 = pneg %p425
    $region46: #{text_decoder_forward.33} parent=5 // pred_check_branch
      %428 = sbr.rel (%p426) target = $region48
    $region47: #{text_decoder_forward.33} parent=5 // pred_region
      %s429 = ssub.s32 %s9, 2
      // Predicated region
      $region49: #{text_decoder_forward.33} parent=47 // pred_check
        %p430 = pneg %p132
      $region50: #{text_decoder_forward.33} parent=47 // pred_check_branch
        %432 = sbr.rel (%p430) target = $region52
      $region51: #{text_decoder_forward.33} parent=47 // pred_region
        %p433 = scmp.lt.s32.totalorder %s20, 7
        %s434 = scalar_select %p433, %s20, 7
        %s435 = smul.addr %s434, 4
        %s436 = scalar_lea.vmem %s3, %s435
      $region52: #{text_decoder_forward.33} parent=47 // pred_fallthru
        _
    $region48: #{text_decoder_forward.33} parent=5 // pred_fallthru
      _
  $region6: #{text_decoder_forward.33} parent=0 // loop_footer
    %s13 = sadd.s32 1, %s9
  $region7: #{text_decoder_forward.33} parent=0 // loop_footer_branch
    %8 = sbr.rel target = $region3
  $region8: #{text_decoder_forward.33} parent=0 // loop_exit
    _

// kernel: text_decoder_forward.37
$region0: #{text_decoder_forward.37}
  #allocation0 [shape = 'u32[]', space=smem, size = 0x4, offset = 0x4, fixed_abs, tag = 'smem constant byte address 0x4 - core index']
  #allocation1 [shape = 'u32[144,128]{1,0:T(1,128)}', space=vmem, size = 0x12000, scoped, tag = 'internal scratch']
  %s0 = inlined_call_operand.vmem [shape: bf16[16,128], index: 0, kind: input, shape index: {}]
  %s1 = inlined_call_operand.vmem [shape: bf16[128,32], index: 1, kind: input, shape index: {}]
  %s2 = inlined_call_operand.vmem [shape: f32[1,32], index: 2, kind: input, shape index: {}]
  %s3 = inlined_call_operand.vmem [shape: bf16[16,32], index: 3, kind: output, shape index: {}]
  %s4 = sld [smem:[#allocation0]]
  $region22: #{text_decoder_forward.37} parent=0
    _
  %s6 = ssub.s32 1, %s4
  %s7 = scalar_select 0, %s6, %s4
  // Predicated region
  $region2: #{text_decoder_forward.37} parent=0 // pred_check
    _
  $region3: #{text_decoder_forward.37} parent=0 // pred_check_branch
    %9 = sbr.rel (0) target = $region5
  $region4: #{text_decoder_forward.37} parent=0 // pred_region
    _
  $region5: #{text_decoder_forward.37} parent=0 // pred_fallthru
    _
  // Predicated region
  $region6: #{text_decoder_forward.37} parent=0 // pred_check
    _
  $region7: #{text_decoder_forward.37} parent=0 // pred_check_branch
    %11 = sbr.rel (0) target = $region9
  $region8: #{text_decoder_forward.37} parent=0 // pred_region
    _
  $region9: #{text_decoder_forward.37} parent=0 // pred_fallthru
    _
  // Predicated region
  $region10: #{text_decoder_forward.37} parent=0 // pred_check
    _
  $region11: #{text_decoder_forward.37} parent=0 // pred_check_branch
    %13 = sbr.rel (0) target = $region13
  $region12: #{text_decoder_forward.37} parent=0 // pred_region
    _
  $region13: #{text_decoder_forward.37} parent=0 // pred_fallthru
    _
  %v15 = vld [vmem:[%s0] sm:$0xf]
  %v16 = vld [vmem:[%s0 + $0x4] sm:$0xf]
  %v17 = vld [vmem:[%s1] sm:$0xf]
  %v18 = vld [vmem:[%s1 + $0x4] sm:$0xf]
  %v19 = vld [vmem:[%s1 + $0x8] sm:$0xf]
  %v20 = vld [vmem:[%s1 + $0xc] sm:$0xf]
  %v21 = vld [vmem:[%s1 + $0x10] sm:$0xf]
  %v22 = vld [vmem:[%s1 + $0x14] sm:$0xf]
  %v23 = vld [vmem:[%s1 + $0x18] sm:$0xf]
  %v24 = vld [vmem:[%s1 + $0x1c] sm:$0xf]
  %v25 = vld [vmem:[%s1 + $0x20] sm:$0xf]
  %v26 = vld [vmem:[%s1 + $0x24] sm:$0xf]
  %v27 = vld [vmem:[%s1 + $0x28] sm:$0xf]
  %v28 = vld [vmem:[%s1 + $0x2c] sm:$0xf]
  %v29 = vld [vmem:[%s1 + $0x30] sm:$0xf]
  %v30 = vld [vmem:[%s1 + $0x34] sm:$0xf]
  %v31 = vld [vmem:[%s1 + $0x38] sm:$0xf]
  %v32 = vld [vmem:[%s1 + $0x3c] sm:$0xf]
  %v33 = vld [vmem:[%s2] sm:$0x1]
  %v35 = vlaneseq
  %v36 = vshrl.u32 %v35, 7
  %v37 = vsub.s32 0, %v36
  %v38 = vrot.slane %v33, %v37
  %v42 = vunpack.c.l.b16 %v15
  %v43 = vunpack.c.l.b16 %v16
  %v44 = vpack.c.b16 %v43, %v42
  %v62 = vunpack.c.l.b16 %v17
  %v63 = vunpack.c.l.b16 %v18
  %v64 = vunpack.c.l.b16 %v19
  %v65 = vunpack.c.l.b16 %v20
  %v66 = vunpack.c.l.b16 %v21
  %v67 = vunpack.c.l.b16 %v22
  %v68 = vunpack.c.l.b16 %v23
  %v69 = vunpack.c.l.b16 %v24
  %v70 = vunpack.c.l.b16 %v25
  %v71 = vunpack.c.l.b16 %v26
  %v72 = vunpack.c.l.b16 %v27
  %v73 = vunpack.c.l.b16 %v28
  %v74 = vunpack.c.l.b16 %v29
  %v75 = vunpack.c.l.b16 %v30
  %v76 = vunpack.c.l.b16 %v31
  %v77 = vunpack.c.l.b16 %v32
  %v78 = vpack.c.b16 %v63, %v62
  %v79 = vpack.c.b16 %v65, %v64
  %v80 = vpack.c.b16 %v67, %v66
  %v81 = vpack.c.b16 %v69, %v68
  %v82 = vpack.c.b16 %v71, %v70
  %v83 = vpack.c.b16 %v73, %v72
  %v84 = vpack.c.b16 %v75, %v74
  %v85 = vpack.c.b16 %v77, %v76
  %94 = vmatprep.subr.bf16.mxu0 0
  %95 = vmatpush1.bf16.msra.mxu0 %v78
  %96 = vmatprep.subr.bf16.mxu0 0
  %97 = vmatpush1.bf16.msra.mxu0 %v79
  %98 = vmatprep.subr.bf16.mxu0 0
  %99 = vmatpush1.bf16.msra.mxu0 %v80
  %100 = vmatprep.subr.bf16.mxu0 0
  %101 = vmatpush1.bf16.msra.mxu0 %v81
  %102 = vmatprep.subr.bf16.mxu0 0
  %103 = vmatpush1.bf16.msra.mxu0 %v82
  %104 = vmatprep.subr.bf16.mxu0 0
  %105 = vmatpush1.bf16.msra.mxu0 %v83
  %106 = vmatprep.subr.bf16.mxu0 0
  %107 = vmatpush1.bf16.msra.mxu0 %v84
  %108 = vmatprep.subr.bf16.mxu0 0
  %109 = vmatpush1.bf16.msra.mxu0 %v85
  %110 = vmatprep.subr.bf16.mxu0 0
  %111 = vmatpush1.bf16.msra.mxu0 0
  %112 = vmatprep.subr.bf16.mxu0 0
  %113 = vmatpush1.bf16.msra.mxu0 0
  %114 = vmatprep.subr.bf16.mxu0 0
  %115 = vmatpush1.bf16.msra.mxu0 0
  %116 = vmatprep.subr.bf16.mxu0 0
  %117 = vmatpush1.bf16.msra.mxu0 0
  %118 = vmatprep.subr.bf16.mxu0 0
  %119 = vmatpush1.bf16.msra.mxu0 0
  %120 = vmatprep.subr.bf16.mxu0 0
  %121 = vmatpush1.bf16.msra.mxu0 0
  %122 = vmatprep.subr.bf16.mxu0 0
  %123 = vmatpush1.bf16.msra.mxu0 0
  %124 = vmatprep.subr.bf16.mxu0 0
  %125 = vmatpush1.bf16.msra.mxu0 0
  %126 = vmatprep.mubr.bf16.mxu0 0
  %127 = vmatmul.mubr.bf16.gmra.mrb[0].mxu0 %v44
  %v128 = vpop.f32.mrb[0].mxu0
  %v129 = vadd.f32 %v38, %v128
  %v130 = vpop.f32.mrb[0].mxu0
  %v131 = vpop.f32.mrb[0].mxu0
  %v132 = vadd.f32 %v38, %v131
  %v133 = vpop.f32.mrb[0].mxu0
  %134 = vdwg.mxu0
  %v135 = vpack.c.bf16 %v132, %v129
  %v137 = vunpack.c.l.b16 %v135
  %v138 = vunpack.c.h.b16 %v135
  %v139 = vpack.c.b16 %v137, %v137
  %v140 = vpack.c.b16 %v138, %v138
  %vm143 = vcmask 257024
  %144 = vst.msk [vmem:[%s3] sm:$0xf] %vm143, %v139
  %145 = vst.msk [vmem:[%s3 + $0x4] sm:$0xf] %vm143, %v140
  // Predicated region
  $region14: #{text_decoder_forward.37} parent=0 // pred_check
    _
  $region15: #{text_decoder_forward.37} parent=0 // pred_check_branch
    %147 = sbr.rel (0) target = $region17
  $region16: #{text_decoder_forward.37} parent=0 // pred_region
    _
  $region17: #{text_decoder_forward.37} parent=0 // pred_fallthru
    _
  // Predicated region
  $region18: #{text_decoder_forward.37} parent=0 // pred_check
    _
  $region19: #{text_decoder_forward.37} parent=0 // pred_check_branch
    %149 = sbr.rel (0) target = $region21
  $region20: #{text_decoder_forward.37} parent=0 // pred_region
    _
  $region21: #{text_decoder_forward.37} parent=0 // pred_fallthru
    _

// kernel: text_decoder_forward.51
$region0: #{text_decoder_forward.51}
  #allocation0 [shape = 'u32[]', space=smem, size = 0x4, offset = 0x4, fixed_abs, tag = 'smem constant byte address 0x4 - core index']
  #allocation1 [shape = 'u32[144,128]{1,0:T(1,128)}', space=vmem, size = 0x12000, scoped, tag = 'internal scratch']
  %s0 = inlined_call_operand.vmem [shape: bf16[16,32], index: 0, kind: input, shape index: {}]
  %s1 = inlined_call_operand.vmem [shape: bf16[32,128], index: 1, kind: input, shape index: {}]
  %s2 = inlined_call_operand.vmem [shape: f32[16,128], index: 2, kind: output, shape index: {}]
  %s3 = sld [smem:[#allocation0]]
  $region18: #{text_decoder_forward.51} parent=0
    _
  %s5 = ssub.s32 1, %s3
  %s6 = scalar_select 0, %s5, %s3
  // Predicated region
  $region2: #{text_decoder_forward.51} parent=0 // pred_check
    _
  $region3: #{text_decoder_forward.51} parent=0 // pred_check_branch
    %8 = sbr.rel (0) target = $region5
  $region4: #{text_decoder_forward.51} parent=0 // pred_region
    _
  $region5: #{text_decoder_forward.51} parent=0 // pred_fallthru
    _
  // Predicated region
  $region6: #{text_decoder_forward.51} parent=0 // pred_check
    _
  $region7: #{text_decoder_forward.51} parent=0 // pred_check_branch
    %10 = sbr.rel (0) target = $region9
  $region8: #{text_decoder_forward.51} parent=0 // pred_region
    _
  $region9: #{text_decoder_forward.51} parent=0 // pred_fallthru
    _
  %v12 = vld [vmem:[%s0] sm:$0xf]
  %v13 = vld [vmem:[%s0 + $0x4] sm:$0xf]
  %v14 = vld [vmem:[%s1] sm:$0xf]
  %v15 = vld [vmem:[%s1 + $0x4] sm:$0xf]
  %v16 = vld [vmem:[%s1 + $0x8] sm:$0xf]
  %v17 = vld [vmem:[%s1 + $0xc] sm:$0xf]
  %v20 = vunpack.c.l.b16 %v12
  %v21 = vunpack.c.l.b16 %v13
  %v22 = vpack.c.b16 %v21, %v20
  %v27 = vunpack.c.l.b16 %v14
  %v28 = vunpack.c.l.b16 %v15
  %v29 = vunpack.c.l.b16 %v16
  %v30 = vunpack.c.l.b16 %v17
  %v31 = vpack.c.b16 %v28, %v27
  %v32 = vpack.c.b16 %v30, %v29
  %vm35 = vcmask 261120
  %v37 = vsel %vm35, %v22, 0
  %39 = vmatprep.subr.bf16.mxu0 0
  %40 = vmatpush1.bf16.msra.mxu0 %v31
  %41 = vmatprep.subr.bf16.mxu0 0
  %42 = vmatpush1.bf16.msra.mxu0 %v32
  %43 = vmatprep.subr.bf16.mxu0 0
  %44 = vmatpush1.bf16.msra.mxu0 0
  %45 = vmatprep.subr.bf16.mxu0 0
  %46 = vmatpush1.bf16.msra.mxu0 0
  %47 = vmatprep.subr.bf16.mxu0 0
  %48 = vmatpush1.bf16.msra.mxu0 0
  %49 = vmatprep.subr.bf16.mxu0 0
  %50 = vmatpush1.bf16.msra.mxu0 0
  %51 = vmatprep.subr.bf16.mxu0 0
  %52 = vmatpush1.bf16.msra.mxu0 0
  %53 = vmatprep.subr.bf16.mxu0 0
  %54 = vmatpush1.bf16.msra.mxu0 0
  %55 = vmatprep.subr.bf16.mxu0 0
  %56 = vmatpush1.bf16.msra.mxu0 0
  %57 = vmatprep.subr.bf16.mxu0 0
  %58 = vmatpush1.bf16.msra.mxu0 0
  %59 = vmatprep.subr.bf16.mxu0 0
  %60 = vmatpush1.bf16.msra.mxu0 0
  %61 = vmatprep.subr.bf16.mxu0 0
  %62 = vmatpush1.bf16.msra.mxu0 0
  %63 = vmatprep.subr.bf16.mxu0 0
  %64 = vmatpush1.bf16.msra.mxu0 0
  %65 = vmatprep.subr.bf16.mxu0 0
  %66 = vmatpush1.bf16.msra.mxu0 0
  %67 = vmatprep.subr.bf16.mxu0 0
  %68 = vmatpush1.bf16.msra.mxu0 0
  %69 = vmatprep.subr.bf16.mxu0 0
  %70 = vmatpush1.bf16.msra.mxu0 0
  %71 = vmatprep.mubr.bf16.mxu0 0
  %72 = vmatmul.mubr.bf16.gmra.mrb[0].mxu0 %v37
  %v73 = vpop.f32.mrb[0].mxu0
  %v74 = vadd.f32 0.0, %v73
  %v75 = vpop.f32.mrb[0].mxu0
  %v76 = vpop.f32.mrb[0].mxu0
  %v77 = vadd.f32 0.0, %v76
  %v78 = vpop.f32.mrb[0].mxu0
  %79 = vdwg.mxu0
  %80 = vst [vmem:[%s2] sm:$0xff] %v74
  %81 = vst [vmem:[%s2 + $0x8] sm:$0xff] %v77
  // Predicated region
  $region10: #{text_decoder_forward.51} parent=0 // pred_check
    _
  $region11: #{text_decoder_forward.51} parent=0 // pred_check_branch
    %83 = sbr.rel (0) target = $region13
  $region12: #{text_decoder_forward.51} parent=0 // pred_region
    _
  $region13: #{text_decoder_forward.51} parent=0 // pred_fallthru
    _
  // Predicated region
  $region14: #{text_decoder_forward.51} parent=0 // pred_check
    _
  $region15: #{text_decoder_forward.51} parent=0 // pred_check_branch
    %85 = sbr.rel (0) target = $region17
  $region16: #{text_decoder_forward.51} parent=0 // pred_region
    _
  $region17: #{text_decoder_forward.51} parent=0 // pred_fallthru
    _

</llo_original>
